<compile_context>
chip_gen: v6e
topology: v6e:2x2x1
jax: 0.10.0
libtpu: 0.0.40
codegen_flags: <defaults>
</compile_context>

<pallas_src>
import math

import jax
import jax.numpy as jnp
from jax.experimental import pallas as pl
from jax.experimental.pallas import tpu as pltpu


# ----------------------------------------------------------------------------
# Module plumbing (mirrors the PyTorch MDConv)
# ----------------------------------------------------------------------------
def _split_channels(channels, num_groups):
    split = [channels // num_groups for _ in range(num_groups)]
    split[0] += channels - sum(split)
    return split


def _fuse_weights(weights, kernel_sizes, k_max):
    """Zero-pad each group's (Cg, k, k) filter to (Cg, Kmax, Kmax), centered,
    and stack along channels -> (C, Kmax, Kmax).  Exact for same-parity kernel
    sizes; the padding zeros are only storage (group-aligned blocks never read
    them)."""
    parts = []
    for w, k in zip(weights, kernel_sizes):
        off = (k_max - k) // 2
        parts.append(
            jnp.pad(w, ((0, 0), (off, k_max - k - off), (off, k_max - k - off))))
    return jnp.concatenate(parts, axis=0)


# ----------------------------------------------------------------------------
# Generation-aware VMEM budgeting
# ----------------------------------------------------------------------------
def _vmem_capacity_bytes():
    try:
        info = pltpu.get_tpu_info()
        for name in ("vmem_capacity_bytes", "vmem_size_bytes"):
            cap = getattr(info, name, None)
            if cap:
                return int(cap)
    except Exception:
        pass
    return 64 * 2**20  # conservative (v7x-sized) default if the query fails


def _budgets():
    """-> (per-step working-set budget, vmem_limit cap, min grid steps)."""
    cap = _vmem_capacity_bytes()
    if cap <= 96 * 2**20:                  # v7x-class: 64 MiB VMEM, 2 TensorCores
        return 6 * 2**20, 44 * 2**20, 2
    return 24 * 2**20, 96 * 2**20, 1       # v5e / v6e: 128 MiB VMEM, 1 TensorCore


def _compiler_params(vmem_need_bytes, limit_cap, semantics):
    limit = int(min(limit_cap, max(32 * 2**20, 2 * int(vmem_need_bytes))))
    return pltpu.CompilerParams(dimension_semantics=semantics,
                                vmem_limit_bytes=limit)


# ----------------------------------------------------------------------------
# Block / chunk sizing helpers
# ----------------------------------------------------------------------------
def _choose_row_block(group_rows, total_rows, budget_rows, min_blocks):
    """Rows-per-block R for the (C*N, H*W) layout.  Returns (R, aligned):
    aligned=True means every block lies inside one channel group, enabling
    per-group tap specialization."""
    g = 0
    for gr in group_rows:
        g = math.gcd(g, gr)
    aligned_cands = [r for r in range(8, g + 1, 8) if g % r == 0]
    if len(group_rows) == 1 and total_rows not in aligned_cands:
        aligned_cands.append(total_rows)

    def pick(cands):
        best = None
        for r in sorted(cands):
            if r <= budget_rows and total_rows // r >= min_blocks:
                best = r
        if best is None:
            for r in sorted(cands):
                if r <= budget_rows:
                    best = r
        if best is None and cands:
            best = min(cands)
        return best

    r = pick(aligned_cands)
    if r is not None:
        return r, True
    generic = [r for r in range(8, total_rows + 1, 8) if total_rows % r == 0]
    if total_rows not in generic:
        generic.append(total_rows)
    return pick(generic), False


def _pick_chunk(R, HW):
    """Row-chunk for the in-kernel accumulation loop: keeps acc / inner / window
    values to a handful of vregs each so large blocks don't spill."""
    if R % 8:
        return R
    target_rows = max(8, (8192 // max(HW, 1)) // 8 * 8)
    best = 8
    for c in range(8, R + 1, 8):
        if R % c == 0 and c <= target_rows:
            best = c
    return best


# ----------------------------------------------------------------------------
# Fast path: stride == 1, odd kernel sizes, lane-flattened (rows, H*W) layout
# ----------------------------------------------------------------------------
def _make_row_kernel(R, H, W, Kmax, unique_ks, A, L, chunk):
    # TODO(synk): bf16 inputs are upcast to f32 for compute; a bf16 tap path
    # (f32 accumulate) would halve scratch/store bytes on v6e/v7x.
    HW = H * W
    Pmax = Kmax // 2
    front_max = Pmax * W + Pmax
    n_chunks = R // chunk

    def kernel(kb_ref, x_ref, w_ref, o_ref, xp_ref):
        # ----- build the halo'd image in VMEM scratch -------------------------
        # Zero halo bands (top/bottom rows + lane end caps).  Re-zeroed every
        # step (cheap: 2*front_max lanes) so the kernel stays correct when the
        # "parallel" grid axis is split across TensorCores, each with its own
        # uninitialized scratch.
        if front_max > 0:
            caps = jnp.zeros((R, front_max), jnp.float32)
            xp_ref[:, pl.ds(A - front_max, front_max)] = caps
            xp_ref[:, pl.ds(A + HW, front_max)] = caps
        # Image lands at lane offset A (multiple of 128) -> dense, unmasked vst.
        xp_ref[:, pl.ds(A, HW)] = x_ref[...].astype(jnp.float32)

        col = jax.lax.broadcasted_iota(jnp.int32, (1, HW), 1) % W  # output column

        def run_for_k(Kg):
            Pg = Kg // 2
            off = (Kmax - Kg) // 2        # centered slot inside the Kmax filter
            base = A - (Pg * W + Pg)      # lane shift of tap (0, 0)

            def do_chunk(r0):
                wf = w_ref[pl.ds(r0, chunk), :].astype(jnp.float32)  # (chunk, Kmax^2)
                acc = jnp.zeros((chunk, HW), jnp.float32)
                for kw in range(Kg):
                    # hoist this kw's weight columns off the inner MAC chain
                    wcols = [
                        jax.lax.slice(
                            wf,
                            (0, (kh + off) * Kmax + (kw + off)),
                            (chunk, (kh + off) * Kmax + (kw + off) + 1))
                        for kh in range(Kg)
                    ]
                    inner = jnp.zeros((chunk, HW), jnp.float32)
                    for kh in range(Kg):
                        win = xp_ref[pl.ds(r0, chunk),
                                     pl.ds(base + kh * W + kw, HW)]
                        inner = inner + win * wcols[kh]
                    # Taps whose true source column fell into the W halo read the
                    # neighbouring row in the flat layout -> mask them to zero
                    # (one-sided compare; only one side can ever be violated).
                    if kw < Pg:
                        inner = jnp.where(col >= (Pg - kw), inner, 0.0)
                    elif kw > Pg:
                        inner = jnp.where(col <= (W - 1 + Pg - kw), inner, 0.0)
                    acc = acc + inner
                o_ref[pl.ds(r0, chunk), :] = acc.astype(o_ref.dtype)

            if n_chunks == 1:
                do_chunk(0)
            else:
                def body(ci, carry):
                    do_chunk(pl.multiple_of(ci * chunk, chunk))
                    return carry
                jax.lax.fori_loop(0, n_chunks, body, 0, unroll=(n_chunks <= 4))

        if len(unique_ks) == 1:
            run_for_k(unique_ks[0])
        else:
            kb = kb_ref[pl.program_id(0)]  # this block's kernel size (SMEM scalar)
            for kg in unique_ks:
                @pl.when(kb == kg)
                def _(kg=kg):
                    run_for_k(kg)

    return kernel


def _mdconv_flat_grouped(x, weights, kernel_sizes, splits):
    N, C, H, W = x.shape
    HW = H * W
    Kmax = max(kernel_sizes)
    KK = Kmax * Kmax
    Pmax = Kmax // 2
    front_max = Pmax * W + Pmax
    A = (-(-front_max // 128) * 128) if front_max > 0 else 0  # 128-lane aligned
    L = A + HW + front_max

    group_rows = [cg * N for cg in splits]
    total_rows = C * N

    step_budget, limit_cap, min_blocks = _budgets()
    row_bytes = 4 * (4 * HW + L + 2 * KK)   # dbl-buffered in/out + scratch + weights
    budget_rows = max(8, step_budget // row_bytes)

    R, aligned = _choose_row_block(group_rows, total_rows, budget_rows, min_blocks)
    num_blocks = total_rows // R
    chunk = _pick_chunk(R, HW)

    # Per-channel filters padded (centered) to Kmax for uniform storage; when
    # blocks are group-aligned, only each group's own Kg x Kg taps are read, so
    # no compute is spent on the padding zeros.
    w_fused = _fuse_weights(weights, kernel_sizes, Kmax).reshape(C, KK)
    w_rows = jnp.repeat(w_fused, N, axis=0)          # row c*N+n -> filter of channel c

    if aligned:
        block_k_list = []
        for k, gr in zip(kernel_sizes, group_rows):
            block_k_list += [k] * (gr // R)
        unique_ks = sorted(set(kernel_sizes))
    else:
        # TODO(synk): no group-aligned row blocking exists for this channel/batch
        # combination; every block runs the Kmax-padded filter (zero taps).
        block_k_list = [Kmax] * num_blocks
        unique_ks = [Kmax]
    block_k = jnp.asarray(block_k_list, dtype=jnp.int32)

    # (channel, batch) row order keeps each group's rows contiguous so blocks
    # never mix kernel sizes.  One wrapper-side transpose each way; the kernel
    # is VALU-bound, so this is cheap relative to the tap work it removes.
    x_rows = x.transpose(1, 0, 2, 3).reshape(total_rows, HW)

    kernel = _make_row_kernel(R, H, W, Kmax, unique_ks, A, L, chunk)

    itemsize = x.dtype.itemsize
    if aligned:
        flops = 2 * N * HW * sum(cg * k * k for cg, k in zip(splits, kernel_sizes))
    else:
        flops = 2 * N * C * HW * KK
    cost = pl.CostEstimate(
        flops=flops,
        transcendentals=0,
        bytes_accessed=2 * total_rows * HW * itemsize + total_rows * KK * 4,
    )
    vmem_need = R * row_bytes

    out_rows = pl.pallas_call(
        kernel,
        out_shape=jax.ShapeDtypeStruct((total_rows, HW), x.dtype),
        grid_spec=pltpu.PrefetchScalarGridSpec(
            num_scalar_prefetch=1,
            grid=(num_blocks,),
            in_specs=[
                pl.BlockSpec((R, HW), lambda b, kb: (b, 0)),
                pl.BlockSpec((R, KK), lambda b, kb: (b, 0)),
            ],
            out_specs=pl.BlockSpec((R, HW), lambda b, kb: (b, 0)),
            scratch_shapes=[pltpu.VMEM((R, L), jnp.float32)],
        ),
        compiler_params=_compiler_params(vmem_need, limit_cap, ("parallel",)),
        cost_estimate=cost,
    )(block_k, x_rows, w_rows)

    return out_rows.reshape(C, N, H, W).transpose(1, 0, 2, 3)


# ----------------------------------------------------------------------------
# Fallback path: stride > 1 or even K (2-D spatial layout, fused groups via
# Kmax padding, in-kernel halo)
# ----------------------------------------------------------------------------
def _make_2d_kernel(Ct, H, W, K, stride):
    P = K // 2
    Hp, Wp = H + 2 * P, W + 2 * P
    Ho = (H + 2 * P - K) // stride + 1
    Wo = (W + 2 * P - K) // stride + 1

    def kernel(x_ref, w_ref, o_ref, xp_ref):
        if P > 0:
            xp_ref[:, pl.ds(0, P), :] = jnp.zeros((Ct, P, Wp), jnp.float32)
            xp_ref[:, pl.ds(P + H, P), :] = jnp.zeros((Ct, P, Wp), jnp.float32)
            xp_ref[:, pl.ds(P, H), pl.ds(0, P)] = jnp.zeros((Ct, H, P), jnp.float32)
            xp_ref[:, pl.ds(P, H), pl.ds(P + W, P)] = jnp.zeros((Ct, H, P), jnp.float32)
        xp_ref[:, pl.ds(P, H), pl.ds(P, W)] = x_ref[0].astype(jnp.float32)

        w = w_ref[...].astype(jnp.float32)   # loaded once
        acc = jnp.zeros((Ct, Ho, Wo), jnp.float32)
        for kh in range(K):
            for kw in range(K):
                if stride == 1:
                    win = xp_ref[:, pl.ds(kh, Ho), pl.ds(kw, Wo)]
                else:
                    # Read only the covering window from the ref, then decimate;
                    # never keeps the whole padded block live as one value.
                    cover = xp_ref[:, pl.ds(kh, (Ho - 1) * stride + 1),
                                      pl.ds(kw, (Wo - 1) * stride + 1)]
                    win = cover[:, ::stride, ::stride]
                acc = acc + win * w[:, kh, kw][:, None, None]
        o_ref[0] = acc.astype(o_ref.dtype)

    return kernel, (Hp, Wp, Ho, Wo)


def _pick_channel_tile(C, bytes_per_channel, budget_bytes):
    best = None
    for ct in range(1, C + 1):
        if C % ct:
            continue
        if ct != C and ct % 8:
            continue
        if ct * bytes_per_channel <= budget_bytes:
            best = ct
    if best is None:
        best = 8 if C % 8 == 0 else C
    return best


def _mdconv_fused_2d(x, w_all, K, stride):
    # TODO(synk): replace with a lane-dense (H*W flattened) + stride^2
    # phase-decimated variant; this path keeps the narrower (H, W) lane layout.
    N, C, H, W = x.shape
    P = K // 2
    Hp, Wp = H + 2 * P, W + 2 * P
    Ho = (H + 2 * P - K) // stride + 1
    Wo = (W + 2 * P - K) // stride + 1

    step_budget, limit_cap, _ = _budgets()
    per_ch = 4 * (2 * H * W + 2 * Ho * Wo + Hp * Wp + 2 * K * K)
    Ct = _pick_channel_tile(C, per_ch, step_budget)
    kernel, _ = _make_2d_kernel(Ct, H, W, K, stride)

    itemsize = x.dtype.itemsize
    cost = pl.CostEstimate(
        flops=2 * N * C * Ho * Wo * K * K,
        transcendentals=0,
        bytes_accessed=(N * C * H * W + N * C * Ho * Wo) * itemsize + C * K * K * 4,
    )
    vmem_need = Ct * per_ch

    return pl.pallas_call(
        kernel,
        out_shape=jax.ShapeDtypeStruct((N, C, Ho, Wo), x.dtype),
        grid_spec=pltpu.PrefetchScalarGridSpec(
            num_scalar_prefetch=0,
            grid=(N, C // Ct),
            in_specs=[
                pl.BlockSpec((1, Ct, H, W), lambda n, cb: (n, cb, 0, 0)),
                pl.BlockSpec((Ct, K, K), lambda n, cb: (cb, 0, 0)),
            ],
            out_specs=pl.BlockSpec((1, Ct, Ho, Wo), lambda n, cb: (n, cb, 0, 0)),
            scratch_shapes=[pltpu.VMEM((Ct, Hp, Wp), jnp.float32)],
        ),
        compiler_params=_compiler_params(vmem_need, limit_cap,
                                         ("parallel", "parallel")),
        cost_estimate=cost,
    )(x, w_all)


# ----------------------------------------------------------------------------
# Public forward: matches MDConv.forward semantics
# ----------------------------------------------------------------------------
def _mdconv_same_parity(x, weights, kernel_sizes, splits, stride):
    k_max = max(kernel_sizes)
    if stride == 1 and k_max % 2 == 1:
        return _mdconv_flat_grouped(x, weights, kernel_sizes, splits)
    w_all = _fuse_weights(weights, kernel_sizes, k_max)
    return _mdconv_fused_2d(x, w_all, k_max, stride)


def mdconv_forward(x, weights, kernel_sizes, stride):
    """Split channels per group, depthwise-conv each group (kernel k, padding
    k//2, groups=Cg, bias=False), concat along channels.  All groups run in one
    fused Pallas kernel whenever the kernel sizes share parity."""
    C = x.shape[1]
    splits = _split_channels(C, len(kernel_sizes))
    if len({k % 2 for k in kernel_sizes}) == 1:
        return _mdconv_same_parity(x, weights, kernel_sizes, splits, stride)
    # Mixed even/odd kernel sizes: per-group outputs differ spatially (the torch
    # module's cat would fail too); run one fused call per group.
    outs, off = [], 0
    for w_g, k, cg in zip(weights, kernel_sizes, splits):
        x_g = jax.lax.slice_in_dim(x, off, off + cg, axis=1)
        outs.append(_mdconv_same_parity(x_g, [w_g], [k], [cg], stride))
        off += cg
    return outs[0] if len(outs) == 1 else jnp.concatenate(outs, axis=1)


# ----------------------------------------------------------------------------
# Pure-JAX reference (for verification only)
# ----------------------------------------------------------------------------
def _reference(x, weights, kernel_sizes, stride):
    C = x.shape[1]
    splits = _split_channels(C, len(kernel_sizes))
    outs, off = [], 0
    for w_g, k, cg in zip(weights, kernel_sizes, splits):
        x_g = jax.lax.slice_in_dim(x, off, off + cg, axis=1)
        p = k // 2
        y = jax.lax.conv_general_dilated(
            x_g, w_g[:, None, :, :],
            window_strides=(stride, stride),
            padding=((p, p), (p, p)),
            dimension_numbers=("NCHW", "OIHW", "NCHW"),
            feature_group_count=cg,
        )
        outs.append(y)
        off += cg
    return jnp.concatenate(outs, axis=1) if len(outs) > 1 else outs[0]


if __name__ == "__main__":
    # Module config: MDConv(channels=8, kernel_size=[3, 5], stride=1)
    channels = 8
    kernel_sizes = [3, 5]
    stride = 1
    N, H, W = 2, 16, 16

    key = jax.random.PRNGKey(0)
    kx, *wkeys = jax.random.split(key, 1 + len(kernel_sizes))
    x = jax.random.normal(kx, (N, channels, H, W), dtype=jnp.float32)

    splits = _split_channels(channels, len(kernel_sizes))
    weights = []
    for wk, k, cg in zip(wkeys, kernel_sizes, splits):
        # nn.Conv2d(cg, cg, k, groups=cg, bias=False).weight is (cg, 1, k, k);
        # stored here as (cg, k, k).
        weights.append(jax.random.normal(wk, (cg, k, k), dtype=jnp.float32) * 0.1)

    fwd = jax.jit(lambda xx, ww: mdconv_forward(xx, ww, kernel_sizes, stride))
    out = jax.block_until_ready(fwd(x, weights))

    ref = _reference(x, weights, kernel_sizes, stride)
    assert out.shape == ref.shape == (N, channels, H, W), (out.shape, ref.shape)
    err = float(jnp.max(jnp.abs(out - ref)))
    assert err < 1e-4, f"max abs err {err}"

    print("KERNEL_OK")
</pallas_src>

<mosaic_0001>
module attributes {stable_mosaic.version = 11 : i64} {
  func.func @kernel(%arg0: i32, %arg1: memref<2xi32, #tpu.memory_space<smem>>, %arg2: memref<8x256xf32, #tpu.memory_space<vmem>>, %arg3: memref<8x25xf32, #tpu.memory_space<vmem>>, %arg4: memref<8x256xf32, #tpu.memory_space<vmem>>, %arg5: memref<8x418xf32, #tpu.memory_space<vmem>>) attributes {dimension_semantics = [#tpu.dimension_semantics<parallel>], iteration_bounds = array<i64: 2>, scalar_prefetch = 1 : i64, scratch_operands = 1 : i64, tpu.core_type = #tpu.core_type<tc>, window_params = [{transform_indices = @transform_0, window_bounds = array<i64: 8, 256>}, {transform_indices = @transform_1, window_bounds = array<i64: 8, 25>}, {transform_indices = @transform_2, window_bounds = array<i64: 8, 256>}]} {
    %cst = arith.constant 0.000000e+00 : f32
    %0 = vector.broadcast %cst : f32 to vector<8x34xf32>
    %c0 = arith.constant 0 : index
    %c94 = arith.constant 94 : index
    %1 = vector.load %arg5[%c0, %c94] : memref<8x418xf32, #tpu.memory_space<vmem>>, vector<8x34xf32>
    tpu.vector_store %arg5[%c0, %c94], %0 {strides = array<i32>} : memref<8x418xf32, #tpu.memory_space<vmem>>, vector<8x34xf32>,
    %c0_0 = arith.constant 0 : index
    %c384 = arith.constant 384 : index
    %2 = vector.load %arg5[%c0_0, %c384] : memref<8x418xf32, #tpu.memory_space<vmem>>, vector<8x34xf32>
    tpu.vector_store %arg5[%c0_0, %c384], %0 {strides = array<i32>} : memref<8x418xf32, #tpu.memory_space<vmem>>, vector<8x34xf32>,
    %c0_1 = arith.constant 0 : index
    %c0_2 = arith.constant 0 : index
    %3 = vector.load %arg2[%c0_1, %c0_2] : memref<8x256xf32, #tpu.memory_space<vmem>>, vector<8x256xf32>
    %c0_3 = arith.constant 0 : index
    %c128 = arith.constant 128 : index
    %4 = vector.load %arg5[%c0_3, %c128] : memref<8x418xf32, #tpu.memory_space<vmem>>, vector<8x256xf32>
    tpu.vector_store %arg5[%c0_3, %c128], %3 {strides = array<i32>} : memref<8x418xf32, #tpu.memory_space<vmem>>, vector<8x256xf32>,
    %5 = tpu.iota {dimensions = array<i32: 1>} : vector<1x256xi32>
    %c16_i32 = arith.constant 16 : i32
    %c0_i32 = arith.constant 0 : i32
    %6 = arith.cmpi eq, %c16_i32, %c0_i32 : i32
    %c1_i32 = arith.constant 1 : i32
    %7 = arith.select %6, %c1_i32, %c16_i32 : i32
    %8 = vector.broadcast %7 : i32 to vector<1x256xi32>
    %9 = arith.remsi %5, %8 : vector<1x256xi32>
    %c0_i32_4 = arith.constant 0 : i32
    %10 = vector.broadcast %c0_i32_4 : i32 to vector<1x256xi32>
    %11 = arith.cmpi ne, %9, %10 : vector<1x256xi32>
    %c0_i32_5 = arith.constant 0 : i32
    %12 = vector.broadcast %c0_i32_5 : i32 to vector<1x256xi32>
    %13 = arith.cmpi slt, %9, %12 : vector<1x256xi32>
    %c0_i32_6 = arith.constant 0 : i32
    %14 = arith.cmpi slt, %7, %c0_i32_6 : i32
    %15 = vector.broadcast %14 : i1 to vector<1x256xi1>
    %16 = vector.broadcast %15 : vector<1x256xi1> to vector<1x256xi1>
    %17 = arith.xori %13, %16 : vector<1x256xi1>
    %18 = arith.andi %17, %11 : vector<1x256xi1>
    %19 = vector.broadcast %7 : i32 to vector<1x256xi32>
    %20 = arith.addi %9, %19 : vector<1x256xi32>
    %21 = arith.select %18, %20, %9 : vector<1x256xi1>, vector<1x256xi32>
    %22 = arith.index_cast %arg0 : i32 to index
    %23 = memref.load %arg1[%22] : memref<2xi32, #tpu.memory_space<smem>>
    %c3_i32 = arith.constant 3 : i32
    %24 = arith.cmpi eq, %23, %c3_i32 : i32
    %25 = arith.extui %24 : i1 to i32
    %c0_i32_7 = arith.constant 0 : i32
    %26 = arith.cmpi ne, %25, %c0_i32_7 : i32
    scf.if %26 {
      %c0_9 = arith.constant 0 : index
      %c0_10 = arith.constant 0 : index
      %30 = vector.load %arg3[%c0_9, %c0_10] : memref<8x25xf32, #tpu.memory_space<vmem>>, vector<8x25xf32>
      %cst_11 = arith.constant 0.000000e+00 : f32
      %31 = vector.broadcast %cst_11 : f32 to vector<8x256xf32>
      %32 = vector.extract_strided_slice %30 {offsets = [0, 6], sizes = [8, 1], strides = [1, 1]} : vector<8x25xf32> to vector<8x1xf32>
      %33 = vector.extract_strided_slice %30 {offsets = [0, 11], sizes = [8, 1], strides = [1, 1]} : vector<8x25xf32> to vector<8x1xf32>
      %34 = vector.extract_strided_slice %30 {offsets = [0, 16], sizes = [8, 1], strides = [1, 1]} : vector<8x25xf32> to vector<8x1xf32>
      %cst_12 = arith.constant 0.000000e+00 : f32
      %35 = vector.broadcast %cst_12 : f32 to vector<8x256xf32>
      %c0_13 = arith.constant 0 : index
      %c111 = arith.constant 111 : index
      %36 = vector.load %arg5[%c0_13, %c111] : memref<8x418xf32, #tpu.memory_space<vmem>>, vector<8x256xf32>
      %37 = vector.broadcast %32 : vector<8x1xf32> to vector<8x256xf32>
      %38 = arith.mulf %36, %37 : vector<8x256xf32>
      %39 = arith.addf %35, %38 : vector<8x256xf32>
      %c0_14 = arith.constant 0 : index
      %c127 = arith.constant 127 : index
      %40 = vector.load %arg5[%c0_14, %c127] : memref<8x418xf32, #tpu.memory_space<vmem>>, vector<8x256xf32>
      %41 = vector.broadcast %33 : vector<8x1xf32> to vector<8x256xf32>
      %42 = arith.mulf %40, %41 : vector<8x256xf32>
      %43 = arith.addf %39, %42 : vector<8x256xf32>
      %c0_15 = arith.constant 0 : index
      %c143 = arith.constant 143 : index
      %44 = vector.load %arg5[%c0_15, %c143] : memref<8x418xf32, #tpu.memory_space<vmem>>, vector<8x256xf32>
      %45 = vector.broadcast %34 : vector<8x1xf32> to vector<8x256xf32>
      %46 = arith.mulf %44, %45 : vector<8x256xf32>
      %47 = arith.addf %43, %46 : vector<8x256xf32>
      %c1_i32_16 = arith.constant 1 : i32
      %48 = vector.broadcast %c1_i32_16 : i32 to vector<1x256xi32>
      %49 = arith.cmpi sge, %21, %48 : vector<1x256xi32>
      %cst_17 = arith.constant 0.000000e+00 : f32
      %50 = vector.shape_cast %49 : vector<1x256xi1> to vector<1x256xi1>
      %51 = vector.broadcast %50 : vector<1x256xi1> to vector<8x256xi1>
      %52 = vector.broadcast %cst_17 : f32 to vector<8x256xf32>
      %53 = arith.select %51, %47, %52 : vector<8x256xi1>, vector<8x256xf32>
      %54 = arith.addf %31, %53 : vector<8x256xf32>
      %55 = vector.extract_strided_slice %30 {offsets = [0, 7], sizes = [8, 1], strides = [1, 1]} : vector<8x25xf32> to vector<8x1xf32>
      %56 = vector.extract_strided_slice %30 {offsets = [0, 12], sizes = [8, 1], strides = [1, 1]} : vector<8x25xf32> to vector<8x1xf32>
      %57 = vector.extract_strided_slice %30 {offsets = [0, 17], sizes = [8, 1], strides = [1, 1]} : vector<8x25xf32> to vector<8x1xf32>
      %cst_18 = arith.constant 0.000000e+00 : f32
      %58 = vector.broadcast %cst_18 : f32 to vector<8x256xf32>
      %c0_19 = arith.constant 0 : index
      %c112 = arith.constant 112 : index
      %59 = vector.load %arg5[%c0_19, %c112] : memref<8x418xf32, #tpu.memory_space<vmem>>, vector<8x256xf32>
      %60 = vector.broadcast %55 : vector<8x1xf32> to vector<8x256xf32>
      %61 = arith.mulf %59, %60 : vector<8x256xf32>
      %62 = arith.addf %58, %61 : vector<8x256xf32>
      %c0_20 = arith.constant 0 : index
      %c128_21 = arith.constant 128 : index
      %63 = vector.load %arg5[%c0_20, %c128_21] : memref<8x418xf32, #tpu.memory_space<vmem>>, vector<8x256xf32>
      %64 = vector.broadcast %56 : vector<8x1xf32> to vector<8x256xf32>
      %65 = arith.mulf %63, %64 : vector<8x256xf32>
      %66 = arith.addf %62, %65 : vector<8x256xf32>
      %c0_22 = arith.constant 0 : index
      %c144 = arith.constant 144 : index
      %67 = vector.load %arg5[%c0_22, %c144] : memref<8x418xf32, #tpu.memory_space<vmem>>, vector<8x256xf32>
      %68 = vector.broadcast %57 : vector<8x1xf32> to vector<8x256xf32>
      %69 = arith.mulf %67, %68 : vector<8x256xf32>
      %70 = arith.addf %66, %69 : vector<8x256xf32>
      %71 = arith.addf %54, %70 : vector<8x256xf32>
      %72 = vector.extract_strided_slice %30 {offsets = [0, 8], sizes = [8, 1], strides = [1, 1]} : vector<8x25xf32> to vector<8x1xf32>
      %73 = vector.extract_strided_slice %30 {offsets = [0, 13], sizes = [8, 1], strides = [1, 1]} : vector<8x25xf32> to vector<8x1xf32>
      %74 = vector.extract_strided_slice %30 {offsets = [0, 18], sizes = [8, 1], strides = [1, 1]} : vector<8x25xf32> to vector<8x1xf32>
      %cst_23 = arith.constant 0.000000e+00 : f32
      %75 = vector.broadcast %cst_23 : f32 to vector<8x256xf32>
      %c0_24 = arith.constant 0 : index
      %c113 = arith.constant 113 : index
      %76 = vector.load %arg5[%c0_24, %c113] : memref<8x418xf32, #tpu.memory_space<vmem>>, vector<8x256xf32>
      %77 = vector.broadcast %72 : vector<8x1xf32> to vector<8x256xf32>
      %78 = arith.mulf %76, %77 : vector<8x256xf32>
      %79 = arith.addf %75, %78 : vector<8x256xf32>
      %c0_25 = arith.constant 0 : index
      %c129 = arith.constant 129 : index
      %80 = vector.load %arg5[%c0_25, %c129] : memref<8x418xf32, #tpu.memory_space<vmem>>, vector<8x256xf32>
      %81 = vector.broadcast %73 : vector<8x1xf32> to vector<8x256xf32>
      %82 = arith.mulf %80, %81 : vector<8x256xf32>
      %83 = arith.addf %79, %82 : vector<8x256xf32>
      %c0_26 = arith.constant 0 : index
      %c145 = arith.constant 145 : index
      %84 = vector.load %arg5[%c0_26, %c145] : memref<8x418xf32, #tpu.memory_space<vmem>>, vector<8x256xf32>
      %85 = vector.broadcast %74 : vector<8x1xf32> to vector<8x256xf32>
      %86 = arith.mulf %84, %85 : vector<8x256xf32>
      %87 = arith.addf %83, %86 : vector<8x256xf32>
      %c14_i32 = arith.constant 14 : i32
      %88 = vector.broadcast %c14_i32 : i32 to vector<1x256xi32>
      %89 = arith.cmpi sle, %21, %88 : vector<1x256xi32>
      %cst_27 = arith.constant 0.000000e+00 : f32
      %90 = vector.shape_cast %89 : vector<1x256xi1> to vector<1x256xi1>
      %91 = vector.broadcast %90 : vector<1x256xi1> to vector<8x256xi1>
      %92 = vector.broadcast %cst_27 : f32 to vector<8x256xf32>
      %93 = arith.select %91, %87, %92 : vector<8x256xi1>, vector<8x256xf32>
      %94 = arith.addf %71, %93 : vector<8x256xf32>
      %c0_28 = arith.constant 0 : index
      %c0_29 = arith.constant 0 : index
      %95 = vector.load %arg4[%c0_28, %c0_29] : memref<8x256xf32, #tpu.memory_space<vmem>>, vector<8x256xf32>
      tpu.vector_store %arg4[%c0_28, %c0_29], %94 {strides = array<i32>} : memref<8x256xf32, #tpu.memory_space<vmem>>, vector<8x256xf32>,
    } else {
    }
    %c5_i32 = arith.constant 5 : i32
    %27 = arith.cmpi eq, %23, %c5_i32 : i32
    %28 = arith.extui %27 : i1 to i32
    %c0_i32_8 = arith.constant 0 : i32
    %29 = arith.cmpi ne, %28, %c0_i32_8 : i32
    scf.if %29 {
      %c0_9 = arith.constant 0 : index
      %c0_10 = arith.constant 0 : index
      %30 = vector.load %arg3[%c0_9, %c0_10] : memref<8x25xf32, #tpu.memory_space<vmem>>, vector<8x25xf32>
      %cst_11 = arith.constant 0.000000e+00 : f32
      %31 = vector.broadcast %cst_11 : f32 to vector<8x256xf32>
      %32 = vector.extract_strided_slice %30 {offsets = [0, 0], sizes = [8, 1], strides = [1, 1]} : vector<8x25xf32> to vector<8x1xf32>
      %33 = vector.extract_strided_slice %30 {offsets = [0, 5], sizes = [8, 1], strides = [1, 1]} : vector<8x25xf32> to vector<8x1xf32>
      %34 = vector.extract_strided_slice %30 {offsets = [0, 10], sizes = [8, 1], strides = [1, 1]} : vector<8x25xf32> to vector<8x1xf32>
      %35 = vector.extract_strided_slice %30 {offsets = [0, 15], sizes = [8, 1], strides = [1, 1]} : vector<8x25xf32> to vector<8x1xf32>
      %36 = vector.extract_strided_slice %30 {offsets = [0, 20], sizes = [8, 1], strides = [1, 1]} : vector<8x25xf32> to vector<8x1xf32>
      %cst_12 = arith.constant 0.000000e+00 : f32
      %37 = vector.broadcast %cst_12 : f32 to vector<8x256xf32>
      %c0_13 = arith.constant 0 : index
      %c94_14 = arith.constant 94 : index
      %38 = vector.load %arg5[%c0_13, %c94_14] : memref<8x418xf32, #tpu.memory_space<vmem>>, vector<8x256xf32>
      %39 = vector.broadcast %32 : vector<8x1xf32> to vector<8x256xf32>
      %40 = arith.mulf %38, %39 : vector<8x256xf32>
      %41 = arith.addf %37, %40 : vector<8x256xf32>
      %c0_15 = arith.constant 0 : index
      %c110 = arith.constant 110 : index
      %42 = vector.load %arg5[%c0_15, %c110] : memref<8x418xf32, #tpu.memory_space<vmem>>, vector<8x256xf32>
      %43 = vector.broadcast %33 : vector<8x1xf32> to vector<8x256xf32>
      %44 = arith.mulf %42, %43 : vector<8x256xf32>
      %45 = arith.addf %41, %44 : vector<8x256xf32>
      %c0_16 = arith.constant 0 : index
      %c126 = arith.constant 126 : index
      %46 = vector.load %arg5[%c0_16, %c126] : memref<8x418xf32, #tpu.memory_space<vmem>>, vector<8x256xf32>
      %47 = vector.broadcast %34 : vector<8x1xf32> to vector<8x256xf32>
      %48 = arith.mulf %46, %47 : vector<8x256xf32>
      %49 = arith.addf %45, %48 : vector<8x256xf32>
      %c0_17 = arith.constant 0 : index
      %c142 = arith.constant 142 : index
      %50 = vector.load %arg5[%c0_17, %c142] : memref<8x418xf32, #tpu.memory_space<vmem>>, vector<8x256xf32>
      %51 = vector.broadcast %35 : vector<8x1xf32> to vector<8x256xf32>
      %52 = arith.mulf %50, %51 : vector<8x256xf32>
      %53 = arith.addf %49, %52 : vector<8x256xf32>
      %c0_18 = arith.constant 0 : index
      %c158 = arith.constant 158 : index
      %54 = vector.load %arg5[%c0_18, %c158] : memref<8x418xf32, #tpu.memory_space<vmem>>, vector<8x256xf32>
      %55 = vector.broadcast %36 : vector<8x1xf32> to vector<8x256xf32>
      %56 = arith.mulf %54, %55 : vector<8x256xf32>
      %57 = arith.addf %53, %56 : vector<8x256xf32>
      %c2_i32 = arith.constant 2 : i32
      %58 = vector.broadcast %c2_i32 : i32 to vector<1x256xi32>
      %59 = arith.cmpi sge, %21, %58 : vector<1x256xi32>
      %cst_19 = arith.constant 0.000000e+00 : f32
      %60 = vector.shape_cast %59 : vector<1x256xi1> to vector<1x256xi1>
      %61 = vector.broadcast %60 : vector<1x256xi1> to vector<8x256xi1>
      %62 = vector.broadcast %cst_19 : f32 to vector<8x256xf32>
      %63 = arith.select %61, %57, %62 : vector<8x256xi1>, vector<8x256xf32>
      %64 = arith.addf %31, %63 : vector<8x256xf32>
      %65 = vector.extract_strided_slice %30 {offsets = [0, 1], sizes = [8, 1], strides = [1, 1]} : vector<8x25xf32> to vector<8x1xf32>
      %66 = vector.extract_strided_slice %30 {offsets = [0, 6], sizes = [8, 1], strides = [1, 1]} : vector<8x25xf32> to vector<8x1xf32>
      %67 = vector.extract_strided_slice %30 {offsets = [0, 11], sizes = [8, 1], strides = [1, 1]} : vector<8x25xf32> to vector<8x1xf32>
      %68 = vector.extract_strided_slice %30 {offsets = [0, 16], sizes = [8, 1], strides = [1, 1]} : vector<8x25xf32> to vector<8x1xf32>
      %69 = vector.extract_strided_slice %30 {offsets = [0, 21], sizes = [8, 1], strides = [1, 1]} : vector<8x25xf32> to vector<8x1xf32>
      %cst_20 = arith.constant 0.000000e+00 : f32
      %70 = vector.broadcast %cst_20 : f32 to vector<8x256xf32>
      %c0_21 = arith.constant 0 : index
      %c95 = arith.constant 95 : index
      %71 = vector.load %arg5[%c0_21, %c95] : memref<8x418xf32, #tpu.memory_space<vmem>>, vector<8x256xf32>
      %72 = vector.broadcast %65 : vector<8x1xf32> to vector<8x256xf32>
      %73 = arith.mulf %71, %72 : vector<8x256xf32>
      %74 = arith.addf %70, %73 : vector<8x256xf32>
      %c0_22 = arith.constant 0 : index
      %c111 = arith.constant 111 : index
      %75 = vector.load %arg5[%c0_22, %c111] : memref<8x418xf32, #tpu.memory_space<vmem>>, vector<8x256xf32>
      %76 = vector.broadcast %66 : vector<8x1xf32> to vector<8x256xf32>
      %77 = arith.mulf %75, %76 : vector<8x256xf32>
      %78 = arith.addf %74, %77 : vector<8x256xf32>
      %c0_23 = arith.constant 0 : index
      %c127 = arith.constant 127 : index
      %79 = vector.load %arg5[%c0_23, %c127] : memref<8x418xf32, #tpu.memory_space<vmem>>, vector<8x256xf32>
      %80 = vector.broadcast %67 : vector<8x1xf32> to vector<8x256xf32>
      %81 = arith.mulf %79, %80 : vector<8x256xf32>
      %82 = arith.addf %78, %81 : vector<8x256xf32>
      %c0_24 = arith.constant 0 : index
      %c143 = arith.constant 143 : index
      %83 = vector.load %arg5[%c0_24, %c143] : memref<8x418xf32, #tpu.memory_space<vmem>>, vector<8x256xf32>
      %84 = vector.broadcast %68 : vector<8x1xf32> to vector<8x256xf32>
      %85 = arith.mulf %83, %84 : vector<8x256xf32>
      %86 = arith.addf %82, %85 : vector<8x256xf32>
      %c0_25 = arith.constant 0 : index
      %c159 = arith.constant 159 : index
      %87 = vector.load %arg5[%c0_25, %c159] : memref<8x418xf32, #tpu.memory_space<vmem>>, vector<8x256xf32>
      %88 = vector.broadcast %69 : vector<8x1xf32> to vector<8x256xf32>
      %89 = arith.mulf %87, %88 : vector<8x256xf32>
      %90 = arith.addf %86, %89 : vector<8x256xf32>
      %c1_i32_26 = arith.constant 1 : i32
      %91 = vector.broadcast %c1_i32_26 : i32 to vector<1x256xi32>
      %92 = arith.cmpi sge, %21, %91 : vector<1x256xi32>
      %cst_27 = arith.constant 0.000000e+00 : f32
      %93 = vector.shape_cast %92 : vector<1x256xi1> to vector<1x256xi1>
      %94 = vector.broadcast %93 : vector<1x256xi1> to vector<8x256xi1>
      %95 = vector.broadcast %cst_27 : f32 to vector<8x256xf32>
      %96 = arith.select %94, %90, %95 : vector<8x256xi1>, vector<8x256xf32>
      %97 = arith.addf %64, %96 : vector<8x256xf32>
      %98 = vector.extract_strided_slice %30 {offsets = [0, 2], sizes = [8, 1], strides = [1, 1]} : vector<8x25xf32> to vector<8x1xf32>
      %99 = vector.extract_strided_slice %30 {offsets = [0, 7], sizes = [8, 1], strides = [1, 1]} : vector<8x25xf32> to vector<8x1xf32>
      %100 = vector.extract_strided_slice %30 {offsets = [0, 12], sizes = [8, 1], strides = [1, 1]} : vector<8x25xf32> to vector<8x1xf32>
      %101 = vector.extract_strided_slice %30 {offsets = [0, 17], sizes = [8, 1], strides = [1, 1]} : vector<8x25xf32> to vector<8x1xf32>
      %102 = vector.extract_strided_slice %30 {offsets = [0, 22], sizes = [8, 1], strides = [1, 1]} : vector<8x25xf32> to vector<8x1xf32>
      %cst_28 = arith.constant 0.000000e+00 : f32
      %103 = vector.broadcast %cst_28 : f32 to vector<8x256xf32>
      %c0_29 = arith.constant 0 : index
      %c96 = arith.constant 96 : index
      %104 = vector.load %arg5[%c0_29, %c96] : memref<8x418xf32, #tpu.memory_space<vmem>>, vector<8x256xf32>
      %105 = vector.broadcast %98 : vector<8x1xf32> to vector<8x256xf32>
      %106 = arith.mulf %104, %105 : vector<8x256xf32>
      %107 = arith.addf %103, %106 : vector<8x256xf32>
      %c0_30 = arith.constant 0 : index
      %c112 = arith.constant 112 : index
      %108 = vector.load %arg5[%c0_30, %c112] : memref<8x418xf32, #tpu.memory_space<vmem>>, vector<8x256xf32>
      %109 = vector.broadcast %99 : vector<8x1xf32> to vector<8x256xf32>
      %110 = arith.mulf %108, %109 : vector<8x256xf32>
      %111 = arith.addf %107, %110 : vector<8x256xf32>
      %c0_31 = arith.constant 0 : index
      %c128_32 = arith.constant 128 : index
      %112 = vector.load %arg5[%c0_31, %c128_32] : memref<8x418xf32, #tpu.memory_space<vmem>>, vector<8x256xf32>
      %113 = vector.broadcast %100 : vector<8x1xf32> to vector<8x256xf32>
      %114 = arith.mulf %112, %113 : vector<8x256xf32>
      %115 = arith.addf %111, %114 : vector<8x256xf32>
      %c0_33 = arith.constant 0 : index
      %c144 = arith.constant 144 : index
      %116 = vector.load %arg5[%c0_33, %c144] : memref<8x418xf32, #tpu.memory_space<vmem>>, vector<8x256xf32>
      %117 = vector.broadcast %101 : vector<8x1xf32> to vector<8x256xf32>
      %118 = arith.mulf %116, %117 : vector<8x256xf32>
      %119 = arith.addf %115, %118 : vector<8x256xf32>
      %c0_34 = arith.constant 0 : index
      %c160 = arith.constant 160 : index
      %120 = vector.load %arg5[%c0_34, %c160] : memref<8x418xf32, #tpu.memory_space<vmem>>, vector<8x256xf32>
      %121 = vector.broadcast %102 : vector<8x1xf32> to vector<8x256xf32>
      %122 = arith.mulf %120, %121 : vector<8x256xf32>
      %123 = arith.addf %119, %122 : vector<8x256xf32>
      %124 = arith.addf %97, %123 : vector<8x256xf32>
      %125 = vector.extract_strided_slice %30 {offsets = [0, 3], sizes = [8, 1], strides = [1, 1]} : vector<8x25xf32> to vector<8x1xf32>
      %126 = vector.extract_strided_slice %30 {offsets = [0, 8], sizes = [8, 1], strides = [1, 1]} : vector<8x25xf32> to vector<8x1xf32>
      %127 = vector.extract_strided_slice %30 {offsets = [0, 13], sizes = [8, 1], strides = [1, 1]} : vector<8x25xf32> to vector<8x1xf32>
      %128 = vector.extract_strided_slice %30 {offsets = [0, 18], sizes = [8, 1], strides = [1, 1]} : vector<8x25xf32> to vector<8x1xf32>
      %129 = vector.extract_strided_slice %30 {offsets = [0, 23], sizes = [8, 1], strides = [1, 1]} : vector<8x25xf32> to vector<8x1xf32>
      %cst_35 = arith.constant 0.000000e+00 : f32
      %130 = vector.broadcast %cst_35 : f32 to vector<8x256xf32>
      %c0_36 = arith.constant 0 : index
      %c97 = arith.constant 97 : index
      %131 = vector.load %arg5[%c0_36, %c97] : memref<8x418xf32, #tpu.memory_space<vmem>>, vector<8x256xf32>
      %132 = vector.broadcast %125 : vector<8x1xf32> to vector<8x256xf32>
      %133 = arith.mulf %131, %132 : vector<8x256xf32>
      %134 = arith.addf %130, %133 : vector<8x256xf32>
      %c0_37 = arith.constant 0 : index
      %c113 = arith.constant 113 : index
      %135 = vector.load %arg5[%c0_37, %c113] : memref<8x418xf32, #tpu.memory_space<vmem>>, vector<8x256xf32>
      %136 = vector.broadcast %126 : vector<8x1xf32> to vector<8x256xf32>
      %137 = arith.mulf %135, %136 : vector<8x256xf32>
      %138 = arith.addf %134, %137 : vector<8x256xf32>
      %c0_38 = arith.constant 0 : index
      %c129 = arith.constant 129 : index
      %139 = vector.load %arg5[%c0_38, %c129] : memref<8x418xf32, #tpu.memory_space<vmem>>, vector<8x256xf32>
      %140 = vector.broadcast %127 : vector<8x1xf32> to vector<8x256xf32>
      %141 = arith.mulf %139, %140 : vector<8x256xf32>
      %142 = arith.addf %138, %141 : vector<8x256xf32>
      %c0_39 = arith.constant 0 : index
      %c145 = arith.constant 145 : index
      %143 = vector.load %arg5[%c0_39, %c145] : memref<8x418xf32, #tpu.memory_space<vmem>>, vector<8x256xf32>
      %144 = vector.broadcast %128 : vector<8x1xf32> to vector<8x256xf32>
      %145 = arith.mulf %143, %144 : vector<8x256xf32>
      %146 = arith.addf %142, %145 : vector<8x256xf32>
      %c0_40 = arith.constant 0 : index
      %c161 = arith.constant 161 : index
      %147 = vector.load %arg5[%c0_40, %c161] : memref<8x418xf32, #tpu.memory_space<vmem>>, vector<8x256xf32>
      %148 = vector.broadcast %129 : vector<8x1xf32> to vector<8x256xf32>
      %149 = arith.mulf %147, %148 : vector<8x256xf32>
      %150 = arith.addf %146, %149 : vector<8x256xf32>
      %c14_i32 = arith.constant 14 : i32
      %151 = vector.broadcast %c14_i32 : i32 to vector<1x256xi32>
      %152 = arith.cmpi sle, %21, %151 : vector<1x256xi32>
      %cst_41 = arith.constant 0.000000e+00 : f32
      %153 = vector.shape_cast %152 : vector<1x256xi1> to vector<1x256xi1>
      %154 = vector.broadcast %153 : vector<1x256xi1> to vector<8x256xi1>
      %155 = vector.broadcast %cst_41 : f32 to vector<8x256xf32>
      %156 = arith.select %154, %150, %155 : vector<8x256xi1>, vector<8x256xf32>
      %157 = arith.addf %124, %156 : vector<8x256xf32>
      %158 = vector.extract_strided_slice %30 {offsets = [0, 4], sizes = [8, 1], strides = [1, 1]} : vector<8x25xf32> to vector<8x1xf32>
      %159 = vector.extract_strided_slice %30 {offsets = [0, 9], sizes = [8, 1], strides = [1, 1]} : vector<8x25xf32> to vector<8x1xf32>
      %160 = vector.extract_strided_slice %30 {offsets = [0, 14], sizes = [8, 1], strides = [1, 1]} : vector<8x25xf32> to vector<8x1xf32>
      %161 = vector.extract_strided_slice %30 {offsets = [0, 19], sizes = [8, 1], strides = [1, 1]} : vector<8x25xf32> to vector<8x1xf32>
      %162 = vector.extract_strided_slice %30 {offsets = [0, 24], sizes = [8, 1], strides = [1, 1]} : vector<8x25xf32> to vector<8x1xf32>
      %cst_42 = arith.constant 0.000000e+00 : f32
      %163 = vector.broadcast %cst_42 : f32 to vector<8x256xf32>
      %c0_43 = arith.constant 0 : index
      %c98 = arith.constant 98 : index
      %164 = vector.load %arg5[%c0_43, %c98] : memref<8x418xf32, #tpu.memory_space<vmem>>, vector<8x256xf32>
      %165 = vector.broadcast %158 : vector<8x1xf32> to vector<8x256xf32>
      %166 = arith.mulf %164, %165 : vector<8x256xf32>
      %167 = arith.addf %163, %166 : vector<8x256xf32>
      %c0_44 = arith.constant 0 : index
      %c114 = arith.constant 114 : index
      %168 = vector.load %arg5[%c0_44, %c114] : memref<8x418xf32, #tpu.memory_space<vmem>>, vector<8x256xf32>
      %169 = vector.broadcast %159 : vector<8x1xf32> to vector<8x256xf32>
      %170 = arith.mulf %168, %169 : vector<8x256xf32>
      %171 = arith.addf %167, %170 : vector<8x256xf32>
      %c0_45 = arith.constant 0 : index
      %c130 = arith.constant 130 : index
      %172 = vector.load %arg5[%c0_45, %c130] : memref<8x418xf32, #tpu.memory_space<vmem>>, vector<8x256xf32>
      %173 = vector.broadcast %160 : vector<8x1xf32> to vector<8x256xf32>
      %174 = arith.mulf %172, %173 : vector<8x256xf32>
      %175 = arith.addf %171, %174 : vector<8x256xf32>
      %c0_46 = arith.constant 0 : index
      %c146 = arith.constant 146 : index
      %176 = vector.load %arg5[%c0_46, %c146] : memref<8x418xf32, #tpu.memory_space<vmem>>, vector<8x256xf32>
      %177 = vector.broadcast %161 : vector<8x1xf32> to vector<8x256xf32>
      %178 = arith.mulf %176, %177 : vector<8x256xf32>
      %179 = arith.addf %175, %178 : vector<8x256xf32>
      %c0_47 = arith.constant 0 : index
      %c162 = arith.constant 162 : index
      %180 = vector.load %arg5[%c0_47, %c162] : memref<8x418xf32, #tpu.memory_space<vmem>>, vector<8x256xf32>
      %181 = vector.broadcast %162 : vector<8x1xf32> to vector<8x256xf32>
      %182 = arith.mulf %180, %181 : vector<8x256xf32>
      %183 = arith.addf %179, %182 : vector<8x256xf32>
      %c13_i32 = arith.constant 13 : i32
      %184 = vector.broadcast %c13_i32 : i32 to vector<1x256xi32>
      %185 = arith.cmpi sle, %21, %184 : vector<1x256xi32>
      %cst_48 = arith.constant 0.000000e+00 : f32
      %186 = vector.shape_cast %185 : vector<1x256xi1> to vector<1x256xi1>
      %187 = vector.broadcast %186 : vector<1x256xi1> to vector<8x256xi1>
      %188 = vector.broadcast %cst_48 : f32 to vector<8x256xf32>
      %189 = arith.select %187, %183, %188 : vector<8x256xi1>, vector<8x256xf32>
      %190 = arith.addf %157, %189 : vector<8x256xf32>
      %c0_49 = arith.constant 0 : index
      %c0_50 = arith.constant 0 : index
      %191 = vector.load %arg4[%c0_49, %c0_50] : memref<8x256xf32, #tpu.memory_space<vmem>>, vector<8x256xf32>
      tpu.vector_store %arg4[%c0_49, %c0_50], %190 {strides = array<i32>} : memref<8x256xf32, #tpu.memory_space<vmem>>, vector<8x256xf32>,
    } else {
    }
    return
  }
  func.func @transform_0(%arg0: i32, %arg1: memref<2xi32, #tpu.memory_space<smem>>) -> (i32, i32) {
    %c0_i32 = arith.constant 0 : i32
    %c0_i32_0 = arith.constant 0 : i32
    return %arg0, %c0_i32 : i32, i32
  }
  func.func @transform_1(%arg0: i32, %arg1: memref<2xi32, #tpu.memory_space<smem>>) -> (i32, i32) {
    %c0_i32 = arith.constant 0 : i32
    %c0_i32_0 = arith.constant 0 : i32
    return %arg0, %c0_i32 : i32, i32
  }
  func.func @transform_2(%arg0: i32, %arg1: memref<2xi32, #tpu.memory_space<smem>>) -> (i32, i32) {
    %c0_i32 = arith.constant 0 : i32
    %c0_i32_0 = arith.constant 0 : i32
    return %arg0, %c0_i32 : i32, i32
  }
}

</mosaic_0001>

<llo_original>
// kernel: _lambda_.1
$region0: #{_lambda_.1}
  #allocation0 [shape = 'u32[]', space=smem, size = 0x4, offset = 0x4, fixed_abs, tag = 'smem constant byte address 0x4 - core index']
  #allocation1 [shape = 'u32[144,128]{1,0:T(1,128)}', space=vmem, size = 0x12000, scoped, tag = 'internal scratch']
  #allocation2 [shape = 'f32[8,418]{1,0:T(8,128)}', space=vmem, size = 0x4000, scoped, tag = 'scratch operand']
  #allocation3 [shape = 's32[1]{0}', space=sflag, size = 0x4, scoped, tag = 'scoped memory for _lambda_.1']
  #allocation4 [shape = 'u8[512]{0}', space=smem, size = 0x200, scoped, tag = 'prefetched SMEM operand 0']
  %s0 = inlined_call_operand.vmem [shape: s32[2], index: 0, kind: input, shape index: {}]
  %s1 = inlined_call_operand.vmem [shape: f32[16,256], index: 1, kind: input, shape index: {}]
  %s2 = inlined_call_operand.vmem [shape: f32[16,25], index: 2, kind: input, shape index: {}]
  %s3 = inlined_call_operand.vmem [shape: f32[16,256], index: 3, kind: output, shape index: {}]
  %s4 = sld [smem:[#allocation0]]
  $region49: #{_lambda_.1} parent=0
    _
  %s6 = ssub.s32 1, %s4
  %s7 = scalar_select 0, %s6, %s4
  %s8 = sshll.u32 %s0, 4
  %s9 = int_to_ptr.vmem [resolvable:$true] %s8
  %11 = dma.vmem_to_smem %s9, 16, [#allocation4], [#allocation3]
  %12 = dma.done [#allocation3], 16
  %13 = sfence
  loop: start=0, step=1, limit=4
  $region2: #{_lambda_.1} parent=0 // loop_pre_header
    _
  $region3: #{_lambda_.1} parent=0 // loop_header
    %s15 = sphi 0, %s19
    %p16 = scmp.ge.s32.totalorder %s15, 4
    %s25 = sphi 0, %s27
    %s28 = sphi 0, %s25
    %s29 = sphi 0, %s28
    %s45 = sphi 0, %s29
    %s51 = sphi 0, %s53
    %s54 = sphi 0, %s51
    %s55 = sphi 0, %s54
    %s71 = sphi 0, %s55
    %s77 = sphi 0, %s79
    %s80 = sphi 0, %s77
    %s81 = sphi 0, %s80
    %s97 = sphi 0, %s81
  $region4: #{_lambda_.1} parent=0 // loop_header_branch
    %18 = sbr.rel (%p16) target = $region8
  $region5: #{_lambda_.1} parent=0 // loop_body
    %s20 = ssub.s32 %s15, 1
    %s21 = ssub.s32 %s15, 2
    %s22 = sadd.s32 %s15, 1
    %s23 = ssub.s32 %s15, %s22
    %p24 = scmp.eq.s32.totalorder %s23, 0
    %s26 = sadd.s32 %s25, 1
    %s27 = scalar_select %p24, %s25, %s26
    %p30 = pneg %p24
    %p31 = scmp.eq.s32.totalorder %s15, 1
    %p32 = por %p30, %p31
    %p33 = scmp.ne.s32.totalorder %s25, %s28
    %p34 = scmp.eq.s32.totalorder %s15, 0
    %p35 = por %p33, %p34
    %p36 = scmp.ne.s32.totalorder %s25, %s28
    %p37 = scmp.eq.s32.totalorder %s20, 1
    %p38 = por %p36, %p37
    %p39 = scmp.ne.s32.totalorder %s28, %s29
    %p40 = scmp.eq.s32.totalorder %s20, 0
    %p41 = por %p39, %p40
    %p42 = scmp.ne.s32.totalorder %s28, %s29
    %p43 = scmp.eq.s32.totalorder %s21, 1
    %p44 = por %p42, %p43
    %p46 = scmp.ne.s32.totalorder %s29, %s45
    %p47 = scmp.eq.s32.totalorder %s21, 0
    %p48 = por %p46, %p47
    %s49 = ssub.s32 %s15, %s22
    %p50 = scmp.eq.s32.totalorder %s49, 0
    %s52 = sadd.s32 %s51, 1
    %s53 = scalar_select %p50, %s51, %s52
    %p56 = pneg %p50
    %p57 = scmp.eq.s32.totalorder %s15, 1
    %p58 = por %p56, %p57
    %p59 = scmp.ne.s32.totalorder %s51, %s54
    %p60 = scmp.eq.s32.totalorder %s15, 0
    %p61 = por %p59, %p60
    %p62 = scmp.ne.s32.totalorder %s51, %s54
    %p63 = scmp.eq.s32.totalorder %s20, 1
    %p64 = por %p62, %p63
    %p65 = scmp.ne.s32.totalorder %s54, %s55
    %p66 = scmp.eq.s32.totalorder %s20, 0
    %p67 = por %p65, %p66
    %p68 = scmp.ne.s32.totalorder %s54, %s55
    %p69 = scmp.eq.s32.totalorder %s21, 1
    %p70 = por %p68, %p69
    %p72 = scmp.ne.s32.totalorder %s55, %s71
    %p73 = scmp.eq.s32.totalorder %s21, 0
    %p74 = por %p72, %p73
    %s75 = ssub.s32 %s15, %s22
    %p76 = scmp.eq.s32.totalorder %s75, 0
    %s78 = sadd.s32 %s77, 1
    %s79 = scalar_select %p76, %s77, %s78
    %p82 = pneg %p76
    %p83 = scmp.eq.s32.totalorder %s15, 1
    %p84 = por %p82, %p83
    %p85 = scmp.ne.s32.totalorder %s77, %s80
    %p86 = scmp.eq.s32.totalorder %s15, 0
    %p87 = por %p85, %p86
    %p88 = scmp.ne.s32.totalorder %s77, %s80
    %p89 = scmp.eq.s32.totalorder %s20, 1
    %p90 = por %p88, %p89
    %p91 = scmp.ne.s32.totalorder %s80, %s81
    %p92 = scmp.eq.s32.totalorder %s20, 0
    %p93 = por %p91, %p92
    %p94 = scmp.ne.s32.totalorder %s80, %s81
    %p95 = scmp.eq.s32.totalorder %s21, 1
    %p96 = por %p94, %p95
    %p98 = scmp.ne.s32.totalorder %s81, %s97
    %p99 = scmp.eq.s32.totalorder %s21, 0
    %p100 = por %p98, %p99
    %p101 = scmp.le.s32.totalorder 1, %s15
    %p102 = scmp.lt.s32.totalorder %s15, 3
    %p103 = pnand %p101, %p102
    %p104 = pneg %p103
    // Predicated region
    $region9: #{_lambda_.1} parent=5 // pred_check
      _
    $region10: #{_lambda_.1} parent=5 // pred_check_branch
      %106 = sbr.rel (%p103) target = $region12
    $region11: #{_lambda_.1} parent=5 // pred_region
      %s107 = ssub.s32 %s15, 1
    $region12: #{_lambda_.1} parent=5 // pred_fallthru
      _
    %p108 = scmp.lt.s32.totalorder %s15, 2
    // Predicated region
    $region13: #{_lambda_.1} parent=5 // pred_check
      %p109 = pneg %p108
    $region14: #{_lambda_.1} parent=5 // pred_check_branch
      %111 = sbr.rel (%p109) target = $region16
    $region15: #{_lambda_.1} parent=5 // pred_region
      // Predicated region
      $region17: #{_lambda_.1} parent=15 // pred_check
        %p112 = pneg %p35
      $region18: #{_lambda_.1} parent=15 // pred_check_branch
        %114 = sbr.rel (%p112) target = $region20
      $region19: #{_lambda_.1} parent=15 // pred_region
        %p115 = scmp.lt.s32.totalorder %s15, 1
        %s116 = scalar_select %p115, %s15, 1
        %s117 = smul.addr %s116, 2
        %s118 = smul.addr %s117, 8
        %s119 = scalar_lea.vmem %s1, %s118
      $region20: #{_lambda_.1} parent=15 // pred_fallthru
        _
      // Predicated region
      $region21: #{_lambda_.1} parent=15 // pred_check
        %p120 = pneg %p61
      $region22: #{_lambda_.1} parent=15 // pred_check_branch
        %122 = sbr.rel (%p120) target = $region24
      $region23: #{_lambda_.1} parent=15 // pred_region
        %p123 = scmp.lt.s32.totalorder %s15, 1
        %s124 = scalar_select %p123, %s15, 1
        %s125 = smul.addr %s124, 8
        %s126 = scalar_lea.vmem %s2, %s125
      $region24: #{_lambda_.1} parent=15 // pred_fallthru
        _
    $region16: #{_lambda_.1} parent=5 // pred_fallthru
      _
    %p127 = scmp.le.s32.totalorder 1, %s15
    %p128 = scmp.lt.s32.totalorder %s15, 3
    %p129 = pnand %p127, %p128
    %p130 = pneg %p129
    // Predicated region
    $region25: #{_lambda_.1} parent=5 // pred_check
      _
    $region26: #{_lambda_.1} parent=5 // pred_check_branch
      %132 = sbr.rel (%p129) target = $region28
    $region27: #{_lambda_.1} parent=5 // pred_region
      %s133 = ssub.s32 %s15, 1
      %p134 = scmp.lt.s32.totalorder %s20, 1
      %s135 = scalar_select %p134, %s20, 1
      %s136 = smul.addr %s135, 2
      %s137 = smul.addr %s136, 8
      %s138 = scalar_lea.vmem %s1, %s137
      %p139 = pneg %p41
      %p140 = pneg %p38
      %p141 = scmp.lt.s32.totalorder %s20, 1
      %s142 = scalar_select %p141, %s20, 1
      %s143 = smul.addr %s142, 8
      %s144 = scalar_lea.vmem %s2, %s143
      %p145 = pneg %p67
      %p146 = pneg %p64
      %p147 = pneg %p93
      %p148 = pneg %p90
      %p149 = scmp.lt.s32.totalorder %s20, 1
      %s150 = scalar_select %p149, %s20, 1
      %s151 = smul.addr %s150, 2
      %s152 = smul.addr %s151, 8
      %s153 = scalar_lea.vmem %s3, %s152
      %p154 = scmp.lt.s32.totalorder %s20, 1
      %s155 = scalar_select %p154, %s20, 1
      %s156 = smul.addr %s155, 2
      %s157 = smul.addr %s156, 8
      %s158 = scalar_lea.vmem %s1, %s157
      %p159 = scmp.lt.s32.totalorder %s20, 1
      %s160 = scalar_select %p159, %s20, 1
      %s161 = smul.addr %s160, 8
      %s162 = scalar_lea.vmem %s2, %s161
      %p163 = scmp.lt.s32.totalorder %s20, 1
      %s164 = scalar_select %p163, %s20, 1
      %s165 = smul.addr %s164, 2
      %s166 = smul.addr %s165, 8
      %s167 = scalar_lea.vmem %s3, %s166
      %vm168 = vcmask 1048304
      %169 = vst.msk [vmem:[#allocation2] sm:$0xff] %vm168, 0.0
      %vm170 = vcmask 277504
      %171 = vst.msk [vmem:[#allocation2 + $0x18] sm:$0xff] %vm170, 0.0
      %v172 = vld [vmem:[%s158] sm:$0xff]
      %v173 = vld [vmem:[%s158 + $0x8] sm:$0xff]
      %174 = vst [vmem:[#allocation2 + $0x8] sm:$0xff] %v172
      %175 = vst [vmem:[#allocation2 + $0x10] sm:$0xff] %v173
      %v176 = vlaneseq
      %v177 = vand.u32 %v176, 127
      %v178 = vadd.s32 %v177, 128
      %vm179 = vcmp.lt.s32.totalorder %v177, 0
      %v180 = vsub.s32 0, %v177
      %v181 = vsel %vm179, %v180, %v177
      %v182 = vshrl.u32 %v181, 4
      %v183 = vand.u32 %v181, 15
      %v184 = vsub.s32 0, %v183
      %v185 = vsel %vm179, %v184, %v183
      %vm186 = vcmp.lt.s32.totalorder %v178, 0
      %v187 = vsub.s32 0, %v178
      %v188 = vsel %vm186, %v187, %v178
      %v189 = vshrl.u32 %v188, 4
      %v190 = vand.u32 %v188, 15
      %v191 = vsub.s32 0, %v190
      %v192 = vsel %vm186, %v191, %v190
      %vm193 = vcmp.ne.s32.totalorder %v185, 0
      %vm194 = vcmp.ne.s32.totalorder %v192, 0
      %vm195 = vcmp.lt.s32.totalorder %v185, 0
      %vm196 = vcmp.lt.s32.totalorder %v192, 0
      %vm197 = vmand %vm195, %vm193
      %vm198 = vmand %vm196, %vm194
      %v199 = vadd.s32 %v185, 16
      %v200 = vadd.s32 %v192, 16
      %v201 = vsel %vm197, %v199, %v185
      %v202 = vsel %vm198, %v200, %v192
      %s203 = sld [smem:[#allocation4 + %s20]]
      %p204 = scmp.eq.s32.totalorder %s203, 3
      // Predicated region
      $region29: #{_lambda_.1} parent=27 // pred_check
        %p205 = pneg %p204
      $region30: #{_lambda_.1} parent=27 // pred_check_branch
        %207 = sbr.rel (%p205) target = $region32
      $region31: #{_lambda_.1} parent=27 // pred_region
        %v208 = vld [vmem:[%s162] sm:$0xff]
        %v209 = vld [vmem:[#allocation2] sm:$0xff]
        %v210 = vld [vmem:[#allocation2 + $0x8] sm:$0xff]
        %v211 = vld [vmem:[#allocation2 + $0x10] sm:$0xff]
        %213 = vset.pattern.permute.xlu0 6
        %214 = vperm.xlu0 %213, %v208
        %v215 = vpop.permute.xlu0 %214
        %v217 = vmul.f32 %v209, %v215
        %v218 = vmul.f32 %v210, %v215
        %v219 = vmul.f32 %v211, %v215
        %v220 = vadd.f32 %v217, 0.0
        %v221 = vadd.f32 %v218, 0.0
        %v222 = vadd.f32 %v219, 0.0
        %223 = vset.pattern.permute.xlu0 11
        %224 = vperm.xlu0 %223, %v208
        %v225 = vpop.permute.xlu0 %224
        %v227 = vmul.f32 %v209, %v225
        %v228 = vmul.f32 %v210, %v225
        %v229 = vmul.f32 %v211, %v225
        %233 = vrot.lane.b32.xlu0 %v227, 112
        %v234 = vpop.permute.xlu0 %233
        %235 = vrot.lane.b32.xlu0 %v228, 112
        %v236 = vpop.permute.xlu0 %235
        %237 = vrot.lane.b32.xlu0 %v229, 112
        %v238 = vpop.permute.xlu0 %237
        %vm239 = vcmask 916480
        %v240 = vsel %vm239, %v234, %v236
        %v241 = vsel %vm239, %v236, %v238
        %v245 = vadd.f32 %v220, %v240
        %v246 = vadd.f32 %v221, %v241
        %v247 = vadd.f32 %v222, %v238
        %v248 = vld [vmem:[#allocation2 + $0x8] sm:$0xff]
        %v249 = vld [vmem:[#allocation2 + $0x10] sm:$0xff]
        %v250 = vld [vmem:[#allocation2 + $0x18] sm:$0xff]
        %251 = vset.pattern.permute.xlu0 16
        %252 = vperm.xlu0 %251, %v208
        %v253 = vpop.permute.xlu0 %252
        %v255 = vmul.f32 %v248, %v253
        %v256 = vmul.f32 %v249, %v253
        %v257 = vmul.f32 %v250, %v253
        %261 = vrot.lane.b32.xlu0 %v255, 96
        %v262 = vpop.permute.xlu0 %261
        %263 = vrot.lane.b32.xlu0 %v256, 96
        %v264 = vpop.permute.xlu0 %263
        %265 = vrot.lane.b32.xlu0 %v257, 96
        %v266 = vpop.permute.xlu0 %265
        %vm267 = vcmask 785408
        %v268 = vsel %vm267, %v262, %v264
        %v269 = vsel %vm267, %v264, %v266
        %v273 = vadd.f32 %v245, %v262
        %v274 = vadd.f32 %v246, %v268
        %v275 = vadd.f32 %v247, %v269
        %vm276 = vcmp.ge.s32.totalorder %v201, 1
        %vm277 = vcmp.ge.s32.totalorder %v202, 1
        %v278 = vsel %vm276, 1, 0
        %v279 = vsel %vm277, 1, 0
        %vm280 = vcmp.eq.s32.totalorder %v278, 1
        %vm281 = vcmp.eq.s32.totalorder %v279, 1
        %285 = vrot.lane.b32.xlu0 %v273, 17
        %v286 = vpop.permute.xlu0 %285
        %287 = vrot.lane.b32.xlu0 %v274, 17
        %v288 = vpop.permute.xlu0 %287
        %289 = vrot.lane.b32.xlu0 %v275, 17
        %v290 = vpop.permute.xlu0 %289
        %vm291 = vcmask 138240
        %v292 = vsel %vm291, %v286, %v288
        %v293 = vsel %vm291, %v288, %v290
        %v296 = vsel %vm280, %v292, 0.0
        %v297 = vsel %vm281, %v293, 0.0
        %v298 = vadd.f32 %v296, 0.0
        %v299 = vadd.f32 %v297, 0.0
        %300 = vset.pattern.permute.xlu0 7
        %301 = vperm.xlu0 %300, %v208
        %v302 = vpop.permute.xlu0 %301
        %v304 = vmul.f32 %v209, %v302
        %v305 = vmul.f32 %v210, %v302
        %v306 = vmul.f32 %v211, %v302
        %v307 = vadd.f32 %v304, 0.0
        %v308 = vadd.f32 %v305, 0.0
        %v309 = vadd.f32 %v306, 0.0
        %310 = vset.pattern.permute.xlu0 12
        %311 = vperm.xlu0 %310, %v208
        %v312 = vpop.permute.xlu0 %311
        %v314 = vmul.f32 %v210, %v312
        %v315 = vmul.f32 %v211, %v312
        %318 = vrot.lane.b32.xlu0 %v314, 112
        %v319 = vpop.permute.xlu0 %318
        %320 = vrot.lane.b32.xlu0 %v315, 112
        %v321 = vpop.permute.xlu0 %320
        %v322 = vsel %vm239, %v319, %v321
        %v326 = vadd.f32 %v307, %v319
        %v327 = vadd.f32 %v308, %v322
        %v328 = vadd.f32 %v309, %v321
        %329 = vset.pattern.permute.xlu0 17
        %330 = vperm.xlu0 %329, %v208
        %v331 = vpop.permute.xlu0 %330
        %v333 = vmul.f32 %v248, %v331
        %v334 = vmul.f32 %v249, %v331
        %v335 = vmul.f32 %v250, %v331
        %339 = vrot.lane.b32.xlu0 %v333, 96
        %v340 = vpop.permute.xlu0 %339
        %341 = vrot.lane.b32.xlu0 %v334, 96
        %v342 = vpop.permute.xlu0 %341
        %343 = vrot.lane.b32.xlu0 %v335, 96
        %v344 = vpop.permute.xlu0 %343
        %v345 = vsel %vm267, %v340, %v342
        %v346 = vsel %vm267, %v342, %v344
        %v350 = vadd.f32 %v326, %v340
        %v351 = vadd.f32 %v327, %v345
        %v352 = vadd.f32 %v328, %v346
        %356 = vrot.lane.b32.xlu0 %v350, 16
        %v357 = vpop.permute.xlu0 %356
        %358 = vrot.lane.b32.xlu0 %v351, 16
        %v359 = vpop.permute.xlu0 %358
        %360 = vrot.lane.b32.xlu0 %v352, 16
        %v361 = vpop.permute.xlu0 %360
        %vm362 = vcmask 130048
        %v363 = vsel %vm362, %v357, %v359
        %v364 = vsel %vm362, %v359, %v361
        %v367 = vadd.f32 %v298, %v363
        %v368 = vadd.f32 %v299, %v364
        %369 = vset.pattern.permute.xlu0 8
        %370 = vperm.xlu0 %369, %v208
        %v371 = vpop.permute.xlu0 %370
        %v373 = vmul.f32 %v209, %v371
        %v374 = vmul.f32 %v210, %v371
        %v375 = vmul.f32 %v211, %v371
        %v376 = vadd.f32 %v373, 0.0
        %v377 = vadd.f32 %v374, 0.0
        %v378 = vadd.f32 %v375, 0.0
        %379 = vset.pattern.permute.xlu0 13
        %380 = vperm.xlu0 %379, %v208
        %v381 = vpop.permute.xlu0 %380
        %v383 = vmul.f32 %v248, %v381
        %v384 = vmul.f32 %v249, %v381
        %v385 = vmul.f32 %v250, %v381
        %389 = vrot.lane.b32.xlu0 %v383, 112
        %v390 = vpop.permute.xlu0 %389
        %391 = vrot.lane.b32.xlu0 %v384, 112
        %v392 = vpop.permute.xlu0 %391
        %393 = vrot.lane.b32.xlu0 %v385, 112
        %v394 = vpop.permute.xlu0 %393
        %v395 = vsel %vm239, %v390, %v392
        %v396 = vsel %vm239, %v392, %v394
        %v400 = vadd.f32 %v376, %v390
        %v401 = vadd.f32 %v377, %v395
        %v402 = vadd.f32 %v378, %v396
        %403 = vset.pattern.permute.xlu0 18
        %404 = vperm.xlu0 %403, %v208
        %v405 = vpop.permute.xlu0 %404
        %v407 = vmul.f32 %v248, %v405
        %v408 = vmul.f32 %v249, %v405
        %v409 = vmul.f32 %v250, %v405
        %413 = vrot.lane.b32.xlu0 %v407, 96
        %v414 = vpop.permute.xlu0 %413
        %415 = vrot.lane.b32.xlu0 %v408, 96
        %v416 = vpop.permute.xlu0 %415
        %417 = vrot.lane.b32.xlu0 %v409, 96
        %v418 = vpop.permute.xlu0 %417
        %v419 = vsel %vm267, %v414, %v416
        %v420 = vsel %vm267, %v416, %v418
        %v424 = vadd.f32 %v400, %v414
        %v425 = vadd.f32 %v401, %v419
        %v426 = vadd.f32 %v402, %v420
        %vm427 = vcmp.le.s32.totalorder %v201, 14
        %vm428 = vcmp.le.s32.totalorder %v202, 14
        %v429 = vsel %vm427, 1, 0
        %v430 = vsel %vm428, 1, 0
        %vm431 = vcmp.eq.s32.totalorder %v429, 1
        %vm432 = vcmp.eq.s32.totalorder %v430, 1
        %436 = vrot.lane.b32.xlu0 %v424, 15
        %v437 = vpop.permute.xlu0 %436
        %438 = vrot.lane.b32.xlu0 %v425, 15
        %v439 = vpop.permute.xlu0 %438
        %440 = vrot.lane.b32.xlu0 %v426, 15
        %v441 = vpop.permute.xlu0 %440
        %vm442 = vcmask 121856
        %v443 = vsel %vm442, %v437, %v439
        %v444 = vsel %vm442, %v439, %v441
        %v447 = vsel %vm431, %v443, 0.0
        %v448 = vsel %vm432, %v444, 0.0
        %v449 = vadd.f32 %v367, %v447
        %v450 = vadd.f32 %v368, %v448
        %451 = vst [vmem:[%s167] sm:$0xff] %v449
        %452 = vst [vmem:[%s167 + $0x8] sm:$0xff] %v450
      $region32: #{_lambda_.1} parent=27 // pred_fallthru
        _
      %p453 = scmp.eq.s32.totalorder %s203, 5
      // Predicated region
      $region33: #{_lambda_.1} parent=27 // pred_check
        %p454 = pneg %p453
      $region34: #{_lambda_.1} parent=27 // pred_check_branch
        %456 = sbr.rel (%p454) target = $region36
      $region35: #{_lambda_.1} parent=27 // pred_region
        %v457 = vld [vmem:[%s162] sm:$0xff]
        %v458 = vld [vmem:[#allocation2] sm:$0xff]
        %v459 = vld [vmem:[#allocation2 + $0x8] sm:$0xff]
        %v460 = vld [vmem:[#allocation2 + $0x10] sm:$0xff]
        %462 = vset.pattern.permute.xlu0 0
        %463 = vperm.xlu0 %462, %v457
        %v464 = vpop.permute.xlu0 %463
        %v466 = vmul.f32 %v458, %v464
        %v467 = vmul.f32 %v459, %v464
        %v468 = vmul.f32 %v460, %v464
        %v469 = vadd.f32 %v466, 0.0
        %v470 = vadd.f32 %v467, 0.0
        %v471 = vadd.f32 %v468, 0.0
        %472 = vset.pattern.permute.xlu0 5
        %473 = vperm.xlu0 %472, %v457
        %v474 = vpop.permute.xlu0 %473
        %v476 = vmul.f32 %v458, %v474
        %v477 = vmul.f32 %v459, %v474
        %v478 = vmul.f32 %v460, %v474
        %482 = vrot.lane.b32.xlu0 %v476, 112
        %v483 = vpop.permute.xlu0 %482
        %484 = vrot.lane.b32.xlu0 %v477, 112
        %v485 = vpop.permute.xlu0 %484
        %486 = vrot.lane.b32.xlu0 %v478, 112
        %v487 = vpop.permute.xlu0 %486
        %vm488 = vcmask 916480
        %v489 = vsel %vm488, %v483, %v485
        %v490 = vsel %vm488, %v485, %v487
        %v494 = vadd.f32 %v469, %v489
        %v495 = vadd.f32 %v470, %v490
        %v496 = vadd.f32 %v471, %v487
        %497 = vset.pattern.permute.xlu0 10
        %498 = vperm.xlu0 %497, %v457
        %v499 = vpop.permute.xlu0 %498
        %v501 = vmul.f32 %v458, %v499
        %v502 = vmul.f32 %v459, %v499
        %v503 = vmul.f32 %v460, %v499
        %507 = vrot.lane.b32.xlu0 %v501, 96
        %v508 = vpop.permute.xlu0 %507
        %509 = vrot.lane.b32.xlu0 %v502, 96
        %v510 = vpop.permute.xlu0 %509
        %511 = vrot.lane.b32.xlu0 %v503, 96
        %v512 = vpop.permute.xlu0 %511
        %vm513 = vcmask 785408
        %v514 = vsel %vm513, %v508, %v510
        %v515 = vsel %vm513, %v510, %v512
        %v519 = vadd.f32 %v494, %v514
        %v520 = vadd.f32 %v495, %v515
        %v521 = vadd.f32 %v496, %v512
        %v522 = vld [vmem:[#allocation2 + $0x8] sm:$0xff]
        %v523 = vld [vmem:[#allocation2 + $0x10] sm:$0xff]
        %v524 = vld [vmem:[#allocation2 + $0x18] sm:$0xff]
        %525 = vset.pattern.permute.xlu0 15
        %526 = vperm.xlu0 %525, %v457
        %v527 = vpop.permute.xlu0 %526
        %v529 = vmul.f32 %v522, %v527
        %v530 = vmul.f32 %v523, %v527
        %v531 = vmul.f32 %v524, %v527
        %535 = vrot.lane.b32.xlu0 %v529, 80
        %v536 = vpop.permute.xlu0 %535
        %537 = vrot.lane.b32.xlu0 %v530, 80
        %v538 = vpop.permute.xlu0 %537
        %539 = vrot.lane.b32.xlu0 %v531, 80
        %v540 = vpop.permute.xlu0 %539
        %vm541 = vcmask 654336
        %v542 = vsel %vm541, %v536, %v538
        %v543 = vsel %vm541, %v538, %v540
        %v547 = vadd.f32 %v519, %v536
        %v548 = vadd.f32 %v520, %v542
        %v549 = vadd.f32 %v521, %v543
        %550 = vset.pattern.permute.xlu0 20
        %551 = vperm.xlu0 %550, %v457
        %v552 = vpop.permute.xlu0 %551
        %v554 = vmul.f32 %v522, %v552
        %v555 = vmul.f32 %v523, %v552
        %v556 = vmul.f32 %v524, %v552
        %560 = vrot.lane.b32.xlu0 %v554, 64
        %v561 = vpop.permute.xlu0 %560
        %562 = vrot.lane.b32.xlu0 %v555, 64
        %v563 = vpop.permute.xlu0 %562
        %564 = vrot.lane.b32.xlu0 %v556, 64
        %v565 = vpop.permute.xlu0 %564
        %vm566 = vcmask 523264
        %v567 = vsel %vm566, %v561, %v563
        %v568 = vsel %vm566, %v563, %v565
        %v572 = vadd.f32 %v547, %v561
        %v573 = vadd.f32 %v548, %v567
        %v574 = vadd.f32 %v549, %v568
        %vm575 = vcmp.ge.s32.totalorder %v201, 2
        %vm576 = vcmp.ge.s32.totalorder %v202, 2
        %v577 = vsel %vm575, 1, 0
        %v578 = vsel %vm576, 1, 0
        %vm579 = vcmp.eq.s32.totalorder %v577, 1
        %vm580 = vcmp.eq.s32.totalorder %v578, 1
        %584 = vrot.lane.b32.xlu0 %v572, 34
        %v585 = vpop.permute.xlu0 %584
        %586 = vrot.lane.b32.xlu0 %v573, 34
        %v587 = vpop.permute.xlu0 %586
        %588 = vrot.lane.b32.xlu0 %v574, 34
        %v589 = vpop.permute.xlu0 %588
        %v590 = vsel %vm170, %v585, %v587
        %v591 = vsel %vm170, %v587, %v589
        %v594 = vsel %vm579, %v590, 0.0
        %v595 = vsel %vm580, %v591, 0.0
        %v596 = vadd.f32 %v594, 0.0
        %v597 = vadd.f32 %v595, 0.0
        %598 = vset.pattern.permute.xlu0 1
        %599 = vperm.xlu0 %598, %v457
        %v600 = vpop.permute.xlu0 %599
        %v602 = vmul.f32 %v458, %v600
        %v603 = vmul.f32 %v459, %v600
        %v604 = vmul.f32 %v460, %v600
        %v605 = vadd.f32 %v602, 0.0
        %v606 = vadd.f32 %v603, 0.0
        %v607 = vadd.f32 %v604, 0.0
        %608 = vset.pattern.permute.xlu0 6
        %609 = vperm.xlu0 %608, %v457
        %v610 = vpop.permute.xlu0 %609
        %v612 = vmul.f32 %v458, %v610
        %v613 = vmul.f32 %v459, %v610
        %v614 = vmul.f32 %v460, %v610
        %618 = vrot.lane.b32.xlu0 %v612, 112
        %v619 = vpop.permute.xlu0 %618
        %620 = vrot.lane.b32.xlu0 %v613, 112
        %v621 = vpop.permute.xlu0 %620
        %622 = vrot.lane.b32.xlu0 %v614, 112
        %v623 = vpop.permute.xlu0 %622
        %v624 = vsel %vm488, %v619, %v621
        %v625 = vsel %vm488, %v621, %v623
        %v629 = vadd.f32 %v605, %v624
        %v630 = vadd.f32 %v606, %v625
        %v631 = vadd.f32 %v607, %v623
        %632 = vset.pattern.permute.xlu0 11
        %633 = vperm.xlu0 %632, %v457
        %v634 = vpop.permute.xlu0 %633
        %v636 = vmul.f32 %v458, %v634
        %v637 = vmul.f32 %v459, %v634
        %v638 = vmul.f32 %v460, %v634
        %642 = vrot.lane.b32.xlu0 %v636, 96
        %v643 = vpop.permute.xlu0 %642
        %644 = vrot.lane.b32.xlu0 %v637, 96
        %v645 = vpop.permute.xlu0 %644
        %646 = vrot.lane.b32.xlu0 %v638, 96
        %v647 = vpop.permute.xlu0 %646
        %v648 = vsel %vm513, %v643, %v645
        %v649 = vsel %vm513, %v645, %v647
        %v653 = vadd.f32 %v629, %v648
        %v654 = vadd.f32 %v630, %v649
        %v655 = vadd.f32 %v631, %v647
        %656 = vset.pattern.permute.xlu0 16
        %657 = vperm.xlu0 %656, %v457
        %v658 = vpop.permute.xlu0 %657
        %v660 = vmul.f32 %v522, %v658
        %v661 = vmul.f32 %v523, %v658
        %v662 = vmul.f32 %v524, %v658
        %666 = vrot.lane.b32.xlu0 %v660, 80
        %v667 = vpop.permute.xlu0 %666
        %668 = vrot.lane.b32.xlu0 %v661, 80
        %v669 = vpop.permute.xlu0 %668
        %670 = vrot.lane.b32.xlu0 %v662, 80
        %v671 = vpop.permute.xlu0 %670
        %v672 = vsel %vm541, %v667, %v669
        %v673 = vsel %vm541, %v669, %v671
        %v677 = vadd.f32 %v653, %v667
        %v678 = vadd.f32 %v654, %v672
        %v679 = vadd.f32 %v655, %v673
        %680 = vset.pattern.permute.xlu0 21
        %681 = vperm.xlu0 %680, %v457
        %v682 = vpop.permute.xlu0 %681
        %v684 = vmul.f32 %v522, %v682
        %v685 = vmul.f32 %v523, %v682
        %v686 = vmul.f32 %v524, %v682
        %690 = vrot.lane.b32.xlu0 %v684, 64
        %v691 = vpop.permute.xlu0 %690
        %692 = vrot.lane.b32.xlu0 %v685, 64
        %v693 = vpop.permute.xlu0 %692
        %694 = vrot.lane.b32.xlu0 %v686, 64
        %v695 = vpop.permute.xlu0 %694
        %v696 = vsel %vm566, %v691, %v693
        %v697 = vsel %vm566, %v693, %v695
        %v701 = vadd.f32 %v677, %v691
        %v702 = vadd.f32 %v678, %v696
        %v703 = vadd.f32 %v679, %v697
        %vm704 = vcmp.ge.s32.totalorder %v201, 1
        %vm705 = vcmp.ge.s32.totalorder %v202, 1
        %v706 = vsel %vm704, 1, 0
        %v707 = vsel %vm705, 1, 0
        %vm708 = vcmp.eq.s32.totalorder %v706, 1
        %vm709 = vcmp.eq.s32.totalorder %v707, 1
        %713 = vrot.lane.b32.xlu0 %v701, 33
        %v714 = vpop.permute.xlu0 %713
        %715 = vrot.lane.b32.xlu0 %v702, 33
        %v716 = vpop.permute.xlu0 %715
        %717 = vrot.lane.b32.xlu0 %v703, 33
        %v718 = vpop.permute.xlu0 %717
        %vm719 = vcmask 269312
        %v720 = vsel %vm719, %v714, %v716
        %v721 = vsel %vm719, %v716, %v718
        %v724 = vsel %vm708, %v720, 0.0
        %v725 = vsel %vm709, %v721, 0.0
        %v726 = vadd.f32 %v596, %v724
        %v727 = vadd.f32 %v597, %v725
        %728 = vset.pattern.permute.xlu0 2
        %729 = vperm.xlu0 %728, %v457
        %v730 = vpop.permute.xlu0 %729
        %v732 = vmul.f32 %v458, %v730
        %v733 = vmul.f32 %v459, %v730
        %v734 = vmul.f32 %v460, %v730
        %v735 = vadd.f32 %v732, 0.0
        %v736 = vadd.f32 %v733, 0.0
        %v737 = vadd.f32 %v734, 0.0
        %738 = vset.pattern.permute.xlu0 7
        %739 = vperm.xlu0 %738, %v457
        %v740 = vpop.permute.xlu0 %739
        %v742 = vmul.f32 %v458, %v740
        %v743 = vmul.f32 %v459, %v740
        %v744 = vmul.f32 %v460, %v740
        %748 = vrot.lane.b32.xlu0 %v742, 112
        %v749 = vpop.permute.xlu0 %748
        %750 = vrot.lane.b32.xlu0 %v743, 112
        %v751 = vpop.permute.xlu0 %750
        %752 = vrot.lane.b32.xlu0 %v744, 112
        %v753 = vpop.permute.xlu0 %752
        %v754 = vsel %vm488, %v749, %v751
        %v755 = vsel %vm488, %v751, %v753
        %v759 = vadd.f32 %v735, %v754
        %v760 = vadd.f32 %v736, %v755
        %v761 = vadd.f32 %v737, %v753
        %762 = vset.pattern.permute.xlu0 12
        %763 = vperm.xlu0 %762, %v457
        %v764 = vpop.permute.xlu0 %763
        %v766 = vmul.f32 %v459, %v764
        %v767 = vmul.f32 %v460, %v764
        %770 = vrot.lane.b32.xlu0 %v766, 96
        %v771 = vpop.permute.xlu0 %770
        %772 = vrot.lane.b32.xlu0 %v767, 96
        %v773 = vpop.permute.xlu0 %772
        %v774 = vsel %vm513, %v771, %v773
        %v778 = vadd.f32 %v759, %v771
        %v779 = vadd.f32 %v760, %v774
        %v780 = vadd.f32 %v761, %v773
        %781 = vset.pattern.permute.xlu0 17
        %782 = vperm.xlu0 %781, %v457
        %v783 = vpop.permute.xlu0 %782
        %v785 = vmul.f32 %v522, %v783
        %v786 = vmul.f32 %v523, %v783
        %v787 = vmul.f32 %v524, %v783
        %791 = vrot.lane.b32.xlu0 %v785, 80
        %v792 = vpop.permute.xlu0 %791
        %793 = vrot.lane.b32.xlu0 %v786, 80
        %v794 = vpop.permute.xlu0 %793
        %795 = vrot.lane.b32.xlu0 %v787, 80
        %v796 = vpop.permute.xlu0 %795
        %v797 = vsel %vm541, %v792, %v794
        %v798 = vsel %vm541, %v794, %v796
        %v802 = vadd.f32 %v778, %v792
        %v803 = vadd.f32 %v779, %v797
        %v804 = vadd.f32 %v780, %v798
        %805 = vset.pattern.permute.xlu0 22
        %806 = vperm.xlu0 %805, %v457
        %v807 = vpop.permute.xlu0 %806
        %v809 = vmul.f32 %v522, %v807
        %v810 = vmul.f32 %v523, %v807
        %v811 = vmul.f32 %v524, %v807
        %815 = vrot.lane.b32.xlu0 %v809, 64
        %v816 = vpop.permute.xlu0 %815
        %817 = vrot.lane.b32.xlu0 %v810, 64
        %v818 = vpop.permute.xlu0 %817
        %819 = vrot.lane.b32.xlu0 %v811, 64
        %v820 = vpop.permute.xlu0 %819
        %v821 = vsel %vm566, %v816, %v818
        %v822 = vsel %vm566, %v818, %v820
        %v826 = vadd.f32 %v802, %v816
        %v827 = vadd.f32 %v803, %v821
        %v828 = vadd.f32 %v804, %v822
        %832 = vrot.lane.b32.xlu0 %v826, 32
        %v833 = vpop.permute.xlu0 %832
        %834 = vrot.lane.b32.xlu0 %v827, 32
        %v835 = vpop.permute.xlu0 %834
        %836 = vrot.lane.b32.xlu0 %v828, 32
        %v837 = vpop.permute.xlu0 %836
        %vm838 = vcmask 261120
        %v839 = vsel %vm838, %v833, %v835
        %v840 = vsel %vm838, %v835, %v837
        %v843 = vadd.f32 %v726, %v839
        %v844 = vadd.f32 %v727, %v840
        %845 = vset.pattern.permute.xlu0 3
        %846 = vperm.xlu0 %845, %v457
        %v847 = vpop.permute.xlu0 %846
        %v849 = vmul.f32 %v458, %v847
        %v850 = vmul.f32 %v459, %v847
        %v851 = vmul.f32 %v460, %v847
        %v852 = vadd.f32 %v849, 0.0
        %v853 = vadd.f32 %v850, 0.0
        %v854 = vadd.f32 %v851, 0.0
        %855 = vset.pattern.permute.xlu0 8
        %856 = vperm.xlu0 %855, %v457
        %v857 = vpop.permute.xlu0 %856
        %v859 = vmul.f32 %v458, %v857
        %v860 = vmul.f32 %v459, %v857
        %v861 = vmul.f32 %v460, %v857
        %865 = vrot.lane.b32.xlu0 %v859, 112
        %v866 = vpop.permute.xlu0 %865
        %867 = vrot.lane.b32.xlu0 %v860, 112
        %v868 = vpop.permute.xlu0 %867
        %869 = vrot.lane.b32.xlu0 %v861, 112
        %v870 = vpop.permute.xlu0 %869
        %v871 = vsel %vm488, %v866, %v868
        %v872 = vsel %vm488, %v868, %v870
        %v876 = vadd.f32 %v852, %v871
        %v877 = vadd.f32 %v853, %v872
        %v878 = vadd.f32 %v854, %v870
        %879 = vset.pattern.permute.xlu0 13
        %880 = vperm.xlu0 %879, %v457
        %v881 = vpop.permute.xlu0 %880
        %v883 = vmul.f32 %v522, %v881
        %v884 = vmul.f32 %v523, %v881
        %v885 = vmul.f32 %v524, %v881
        %889 = vrot.lane.b32.xlu0 %v883, 96
        %v890 = vpop.permute.xlu0 %889
        %891 = vrot.lane.b32.xlu0 %v884, 96
        %v892 = vpop.permute.xlu0 %891
        %893 = vrot.lane.b32.xlu0 %v885, 96
        %v894 = vpop.permute.xlu0 %893
        %v895 = vsel %vm513, %v890, %v892
        %v896 = vsel %vm513, %v892, %v894
        %v900 = vadd.f32 %v876, %v890
        %v901 = vadd.f32 %v877, %v895
        %v902 = vadd.f32 %v878, %v896
        %903 = vset.pattern.permute.xlu0 18
        %904 = vperm.xlu0 %903, %v457
        %v905 = vpop.permute.xlu0 %904
        %v907 = vmul.f32 %v522, %v905
        %v908 = vmul.f32 %v523, %v905
        %v909 = vmul.f32 %v524, %v905
        %913 = vrot.lane.b32.xlu0 %v907, 80
        %v914 = vpop.permute.xlu0 %913
        %915 = vrot.lane.b32.xlu0 %v908, 80
        %v916 = vpop.permute.xlu0 %915
        %917 = vrot.lane.b32.xlu0 %v909, 80
        %v918 = vpop.permute.xlu0 %917
        %v919 = vsel %vm541, %v914, %v916
        %v920 = vsel %vm541, %v916, %v918
        %v924 = vadd.f32 %v900, %v914
        %v925 = vadd.f32 %v901, %v919
        %v926 = vadd.f32 %v902, %v920
        %927 = vset.pattern.permute.xlu0 23
        %928 = vperm.xlu0 %927, %v457
        %v929 = vpop.permute.xlu0 %928
        %v931 = vmul.f32 %v522, %v929
        %v932 = vmul.f32 %v523, %v929
        %v933 = vmul.f32 %v524, %v929
        %937 = vrot.lane.b32.xlu0 %v931, 64
        %v938 = vpop.permute.xlu0 %937
        %939 = vrot.lane.b32.xlu0 %v932, 64
        %v940 = vpop.permute.xlu0 %939
        %941 = vrot.lane.b32.xlu0 %v933, 64
        %v942 = vpop.permute.xlu0 %941
        %v943 = vsel %vm566, %v938, %v940
        %v944 = vsel %vm566, %v940, %v942
        %v948 = vadd.f32 %v924, %v938
        %v949 = vadd.f32 %v925, %v943
        %v950 = vadd.f32 %v926, %v944
        %vm951 = vcmp.le.s32.totalorder %v201, 14
        %vm952 = vcmp.le.s32.totalorder %v202, 14
        %v953 = vsel %vm951, 1, 0
        %v954 = vsel %vm952, 1, 0
        %vm955 = vcmp.eq.s32.totalorder %v953, 1
        %vm956 = vcmp.eq.s32.totalorder %v954, 1
        %960 = vrot.lane.b32.xlu0 %v948, 31
        %v961 = vpop.permute.xlu0 %960
        %962 = vrot.lane.b32.xlu0 %v949, 31
        %v963 = vpop.permute.xlu0 %962
        %964 = vrot.lane.b32.xlu0 %v950, 31
        %v965 = vpop.permute.xlu0 %964
        %vm966 = vcmask 252928
        %v967 = vsel %vm966, %v961, %v963
        %v968 = vsel %vm966, %v963, %v965
        %v971 = vsel %vm955, %v967, 0.0
        %v972 = vsel %vm956, %v968, 0.0
        %v973 = vadd.f32 %v843, %v971
        %v974 = vadd.f32 %v844, %v972
        %975 = vset.pattern.permute.xlu0 4
        %976 = vperm.xlu0 %975, %v457
        %v977 = vpop.permute.xlu0 %976
        %v979 = vmul.f32 %v458, %v977
        %v980 = vmul.f32 %v459, %v977
        %v981 = vmul.f32 %v460, %v977
        %v982 = vadd.f32 %v979, 0.0
        %v983 = vadd.f32 %v980, 0.0
        %v984 = vadd.f32 %v981, 0.0
        %985 = vset.pattern.permute.xlu0 9
        %986 = vperm.xlu0 %985, %v457
        %v987 = vpop.permute.xlu0 %986
        %v989 = vmul.f32 %v458, %v987
        %v990 = vmul.f32 %v459, %v987
        %v991 = vmul.f32 %v460, %v987
        %995 = vrot.lane.b32.xlu0 %v989, 112
        %v996 = vpop.permute.xlu0 %995
        %997 = vrot.lane.b32.xlu0 %v990, 112
        %v998 = vpop.permute.xlu0 %997
        %999 = vrot.lane.b32.xlu0 %v991, 112
        %v1000 = vpop.permute.xlu0 %999
        %v1001 = vsel %vm488, %v996, %v998
        %v1002 = vsel %vm488, %v998, %v1000
        %v1006 = vadd.f32 %v982, %v1001
        %v1007 = vadd.f32 %v983, %v1002
        %v1008 = vadd.f32 %v984, %v1000
        %1009 = vset.pattern.permute.xlu0 14
        %1010 = vperm.xlu0 %1009, %v457
        %v1011 = vpop.permute.xlu0 %1010
        %v1013 = vmul.f32 %v522, %v1011
        %v1014 = vmul.f32 %v523, %v1011
        %v1015 = vmul.f32 %v524, %v1011
        %1019 = vrot.lane.b32.xlu0 %v1013, 96
        %v1020 = vpop.permute.xlu0 %1019
        %1021 = vrot.lane.b32.xlu0 %v1014, 96
        %v1022 = vpop.permute.xlu0 %1021
        %1023 = vrot.lane.b32.xlu0 %v1015, 96
        %v1024 = vpop.permute.xlu0 %1023
        %v1025 = vsel %vm513, %v1020, %v1022
        %v1026 = vsel %vm513, %v1022, %v1024
        %v1030 = vadd.f32 %v1006, %v1020
        %v1031 = vadd.f32 %v1007, %v1025
        %v1032 = vadd.f32 %v1008, %v1026
        %1033 = vset.pattern.permute.xlu0 19
        %1034 = vperm.xlu0 %1033, %v457
        %v1035 = vpop.permute.xlu0 %1034
        %v1037 = vmul.f32 %v522, %v1035
        %v1038 = vmul.f32 %v523, %v1035
        %v1039 = vmul.f32 %v524, %v1035
        %1043 = vrot.lane.b32.xlu0 %v1037, 80
        %v1044 = vpop.permute.xlu0 %1043
        %1045 = vrot.lane.b32.xlu0 %v1038, 80
        %v1046 = vpop.permute.xlu0 %1045
        %1047 = vrot.lane.b32.xlu0 %v1039, 80
        %v1048 = vpop.permute.xlu0 %1047
        %v1049 = vsel %vm541, %v1044, %v1046
        %v1050 = vsel %vm541, %v1046, %v1048
        %v1054 = vadd.f32 %v1030, %v1044
        %v1055 = vadd.f32 %v1031, %v1049
        %v1056 = vadd.f32 %v1032, %v1050
        %1057 = vset.pattern.permute.xlu0 24
        %1058 = vperm.xlu0 %1057, %v457
        %v1059 = vpop.permute.xlu0 %1058
        %v1061 = vmul.f32 %v522, %v1059
        %v1062 = vmul.f32 %v523, %v1059
        %v1063 = vmul.f32 %v524, %v1059
        %1067 = vrot.lane.b32.xlu0 %v1061, 64
        %v1068 = vpop.permute.xlu0 %1067
        %1069 = vrot.lane.b32.xlu0 %v1062, 64
        %v1070 = vpop.permute.xlu0 %1069
        %1071 = vrot.lane.b32.xlu0 %v1063, 64
        %v1072 = vpop.permute.xlu0 %1071
        %v1073 = vsel %vm566, %v1068, %v1070
        %v1074 = vsel %vm566, %v1070, %v1072
        %v1078 = vadd.f32 %v1054, %v1068
        %v1079 = vadd.f32 %v1055, %v1073
        %v1080 = vadd.f32 %v1056, %v1074
        %vm1081 = vcmp.le.s32.totalorder %v201, 13
        %vm1082 = vcmp.le.s32.totalorder %v202, 13
        %v1083 = vsel %vm1081, 1, 0
        %v1084 = vsel %vm1082, 1, 0
        %vm1085 = vcmp.eq.s32.totalorder %v1083, 1
        %vm1086 = vcmp.eq.s32.totalorder %v1084, 1
        %1090 = vrot.lane.b32.xlu0 %v1078, 30
        %v1091 = vpop.permute.xlu0 %1090
        %1092 = vrot.lane.b32.xlu0 %v1079, 30
        %v1093 = vpop.permute.xlu0 %1092
        %1094 = vrot.lane.b32.xlu0 %v1080, 30
        %v1095 = vpop.permute.xlu0 %1094
        %vm1096 = vcmask 244736
        %v1097 = vsel %vm1096, %v1091, %v1093
        %v1098 = vsel %vm1096, %v1093, %v1095
        %v1101 = vsel %vm1085, %v1097, 0.0
        %v1102 = vsel %vm1086, %v1098, 0.0
        %v1103 = vadd.f32 %v973, %v1101
        %v1104 = vadd.f32 %v974, %v1102
        %1105 = vst [vmem:[%s167] sm:$0xff] %v1103
        %1106 = vst [vmem:[%s167 + $0x8] sm:$0xff] %v1104
      $region36: #{_lambda_.1} parent=27 // pred_fallthru
        _
      %p1107 = scmp.lt.s32.totalorder %s20, 1
      %s1108 = scalar_select %p1107, %s20, 1
      %s1109 = smul.addr %s1108, 2
      %s1110 = smul.addr %s1109, 8
      %s1111 = scalar_lea.vmem %s3, %s1110
      // Predicated region
      $region37: #{_lambda_.1} parent=27 // pred_check
        %p1112 = pneg %p90
      $region38: #{_lambda_.1} parent=27 // pred_check_branch
        %1114 = sbr.rel (%p1112) target = $region40
      $region39: #{_lambda_.1} parent=27 // pred_region
        _
      $region40: #{_lambda_.1} parent=27 // pred_fallthru
        _
    $region28: #{_lambda_.1} parent=5 // pred_fallthru
      _
    %p1115 = scmp.le.s32.totalorder 2, %s15
    // Predicated region
    $region41: #{_lambda_.1} parent=5 // pred_check
      %p1116 = pneg %p1115
    $region42: #{_lambda_.1} parent=5 // pred_check_branch
      %1118 = sbr.rel (%p1116) target = $region44
    $region43: #{_lambda_.1} parent=5 // pred_region
      %s1119 = ssub.s32 %s15, 2
      // Predicated region
      $region45: #{_lambda_.1} parent=43 // pred_check
        %p1120 = pneg %p96
      $region46: #{_lambda_.1} parent=43 // pred_check_branch
        %1122 = sbr.rel (%p1120) target = $region48
      $region47: #{_lambda_.1} parent=43 // pred_region
        %p1123 = scmp.lt.s32.totalorder %s21, 1
        %s1124 = scalar_select %p1123, %s21, 1
        %s1125 = smul.addr %s1124, 2
        %s1126 = smul.addr %s1125, 8
        %s1127 = scalar_lea.vmem %s3, %s1126
      $region48: #{_lambda_.1} parent=43 // pred_fallthru
        _
    $region44: #{_lambda_.1} parent=5 // pred_fallthru
      _
  $region6: #{_lambda_.1} parent=0 // loop_footer
    %s19 = sadd.s32 1, %s15
  $region7: #{_lambda_.1} parent=0 // loop_footer_branch
    %14 = sbr.rel target = $region3
  $region8: #{_lambda_.1} parent=0 // loop_exit
    _

</llo_original>
